<compile_context>
chip_gen: v5e
topology: v5e:2x2
jax: 0.10.0
libtpu: 0.0.40
codegen_flags: <defaults>
</compile_context>

<pallas_src>
import jax
import jax.numpy as jnp
from jax.experimental import pallas as pl
from jax.experimental.pallas import tpu as pltpu


# ----------------------------- configuration --------------------------------
POS_INPUT = 24     # positional-encoding input dim
DIR_INPUT = 12     # view-direction-encoding input dim
IN_WIDTH = 48      # fused [pos | dir | zero-pad] input lanes (16-aligned)
POS_DEPTH = 4      # number of layers in pos_layer_lst
POS_WIDTH = 64
DIR_WIDTH = 32
DENSITY_DIM = 1    # must be 1 for the module's slicing to be shape-consistent
RGB_DIM = 3
SKIP_LAYER = 2     # concat [pos, p] after forward layer index == SKIP_LAYER
OUT_WIDTH = RGB_DIM + DENSITY_DIM   # fused output: rgb lanes 0:3, sigma lane 3

TILE_N = 2048      # rows per grid step (sweep 2048-4096 in production)
LANES = 128


def _round_up(x, m):
    return (x + m - 1) // m * m


# ------------------------------- kernel -------------------------------------
def _nerf_kernel(inp_ref, w0s_ref, w1_ref, w2_ref, w3p_ref, wfs_ref,
                 wdf_ref, wdd_ref, wrgb_ref, b_ref, out_ref):
    f32 = jnp.float32
    bf16 = jnp.bfloat16

    def B(row):                        # (1, 128) f32 bias row, broadcasts over rows
        return b_ref[row:row + 1, :]

    def mm(x, w_ref_):                 # bf16 operands, f32 accumulation on the MXU
        return jnp.dot(x, w_ref_[...], preferred_element_type=f32)

    inp = inp_ref[...]                                     # (tile, 48) bf16

    # layer 0 merged with the skip-layer pos contribution (shared LHS = pos):
    #   lanes 0:64   = pos @ W3[:24]      (raw skip contribution, no bias)
    #   lanes 64:128 = pos @ W0 + b0      (layer-0 pre-activation)
    m0 = mm(inp, w0s_ref) + B(0)
    p = jnp.maximum(m0, 0.0)                               # layer-0 act at lanes 64:128
    p = jnp.maximum(mm(p.astype(bf16), w1_ref) + B(1), 0.0)    # act at lanes 0:64
    p = jnp.maximum(mm(p.astype(bf16), w2_ref) + B(2), 0.0)    # act at lanes 0:64
    # skip layer: cat([pos, p2]) @ W3 == p2 @ W3[24:] + (pos @ W3[:24]  in m0 lanes 0:64)
    p = jnp.maximum(mm(p.astype(bf16), w3p_ref) + m0 + B(3), 0.0)
    # feature layer (no activation): lanes 0:64 = feat, lane 64 = sigma pre-relu
    fs = mm(p.astype(bf16), wfs_ref) + B(4)
    # dir layer: cat([feat, dir]) @ Wd ; sigma rides to lane 32 via an identity weight
    h = jnp.maximum(mm(fs.astype(bf16), wdf_ref) + mm(inp, wdd_ref) + B(5), 0.0)
    # rgb head ; sigma rides to lane 3 via an identity weight
    pre = mm(h.astype(bf16), wrgb_ref) + B(6)

    pre = pre[:, :OUT_WIDTH]                               # (tile, 4)
    lane = jax.lax.broadcasted_iota(jnp.int32, pre.shape, 1)
    out = jnp.where(lane < RGB_DIM,
                    jax.nn.sigmoid(pre),                   # rgb   = sigmoid(...)
                    jnp.maximum(pre, 0.0))                 # sigma = relu(...) (already >=0)
    out_ref[...] = out.astype(out_ref.dtype)


# ------------------------- weight packing (wrapper side) ----------------------
def pack_params(params):
    """params: original-layout flat list [W0,b0,...,Wf,bf,Wd,bd,Wr,br],
    W:(in,out), b:(out,).  Returns (8 bf16 weight blocks..., f32 bias slab)."""
    assert DENSITY_DIM == 1, "fused sigma lane layout assumes density_dim == 1"
    assert POS_INPUT + DIR_INPUT <= IN_WIDTH

    pos_ws = [params[2 * i] for i in range(POS_DEPTH)]
    pos_bs = [params[2 * i + 1] for i in range(POS_DEPTH)]
    Wf, bf = params[2 * POS_DEPTH], params[2 * POS_DEPTH + 1]
    Wd, bd = params[2 * POS_DEPTH + 2], params[2 * POS_DEPTH + 3]
    Wr, br = params[2 * POS_DEPTH + 4], params[2 * POS_DEPTH + 5]
    Wskip = pos_ws[SKIP_LAYER + 1]                         # (POS_INPUT + POS_WIDTH, POS_WIDTH)

    def blk(rows):
        return jnp.zeros((rows, LANES), jnp.float32)

    # layer-0 + skip(pos-part) merged: lanes 0:64 = W3[:24], lanes 64:128 = W0
    w0s = blk(IN_WIDTH)
    w0s = w0s.at[:POS_INPUT, :POS_WIDTH].set(Wskip[:POS_INPUT, :])
    w0s = w0s.at[:POS_INPUT, POS_WIDTH:2 * POS_WIDTH].set(pos_ws[0])
    # layer 1 consumes the layer-0 activation, which lives at lanes 64:128 of p0
    w1 = blk(LANES).at[POS_WIDTH:2 * POS_WIDTH, :POS_WIDTH].set(pos_ws[1])
    # layer 2 (standard, lanes 0:64)
    w2 = blk(LANES).at[:POS_WIDTH, :POS_WIDTH].set(pos_ws[2])
    # layer 3 (skip layer), p-part only; pos-part comes from m0
    w3p = blk(LANES).at[:POS_WIDTH, :POS_WIDTH].set(Wskip[POS_INPUT:, :])
    # feature layer: feat cols at lanes 0:64, sigma column at lane 64
    wfs = blk(LANES).at[:POS_WIDTH, :POS_WIDTH].set(Wf[:, DENSITY_DIM:])
    wfs = wfs.at[:POS_WIDTH, POS_WIDTH:POS_WIDTH + DENSITY_DIM].set(Wf[:, :DENSITY_DIM])
    # dir layer, feat part + identity pass-through of sigma_pre to lane DIR_WIDTH
    wdf = blk(LANES).at[:POS_WIDTH, :DIR_WIDTH].set(Wd[:POS_WIDTH, :])
    wdf = wdf.at[POS_WIDTH, DIR_WIDTH].set(1.0)
    # dir layer, dir part (consumes the fused input; dirs live at lanes 24:36)
    wdd = blk(IN_WIDTH).at[POS_INPUT:POS_INPUT + DIR_INPUT, :DIR_WIDTH].set(Wd[POS_WIDTH:, :])
    # rgb head + identity pass-through of sigma to lane RGB_DIM
    wrgb = blk(LANES).at[:DIR_WIDTH, :RGB_DIM].set(Wr)
    wrgb = wrgb.at[DIR_WIDTH, RGB_DIM].set(1.0)

    b_slab = jnp.zeros((8, LANES), jnp.float32)
    b_slab = b_slab.at[0, POS_WIDTH:2 * POS_WIDTH].set(pos_bs[0])   # b0 with layer-0 lanes
    b_slab = b_slab.at[1, :POS_WIDTH].set(pos_bs[1])
    b_slab = b_slab.at[2, :POS_WIDTH].set(pos_bs[2])
    b_slab = b_slab.at[3, :POS_WIDTH].set(pos_bs[SKIP_LAYER + 1])
    b_slab = b_slab.at[4, :POS_WIDTH].set(bf[DENSITY_DIM:])
    b_slab = b_slab.at[4, POS_WIDTH].set(bf[0])
    b_slab = b_slab.at[5, :DIR_WIDTH].set(bd)
    b_slab = b_slab.at[6, :RGB_DIM].set(br)

    weights = tuple(w.astype(jnp.bfloat16)
                    for w in (w0s, w1, w2, w3p, wfs, wdf, wdd, wrgb))
    return weights + (b_slab,)


# ------------------------------ wrapper --------------------------------------
def nerf_forward(pos, dirs, packed, *, tile_n=TILE_N):
    """pos: [N, POS_INPUT] f32, dirs: [N, DIR_INPUT] f32, packed = pack_params(...).
    Returns (rgb [N, RGB_DIM], sigma [N])."""
    *weights, b_slab = packed
    n = pos.shape[0]
    tile = max(8, min(tile_n, _round_up(n, 8)))            # clamp for small batches
    n_pad = _round_up(n, tile)

    # fused bf16 input: lanes 0:24 = pos, 24:36 = dir, 36:48 = 0  (one DMA stream)
    inp = jnp.zeros((n_pad, IN_WIDTH), jnp.float32)
    inp = inp.at[:n, :POS_INPUT].set(pos)
    inp = inp.at[:n, POS_INPUT:POS_INPUT + DIR_INPUT].set(dirs)
    inp = inp.astype(jnp.bfloat16)

    grid = (n_pad // tile,)
    const = lambda i: (0, 0)                               # resident weights / biases
    in_specs = [pl.BlockSpec((tile, IN_WIDTH), lambda i: (i, 0))]
    in_specs += [pl.BlockSpec(w.shape, const) for w in weights]
    in_specs += [pl.BlockSpec(b_slab.shape, const)]

    out = pl.pallas_call(
        _nerf_kernel,
        out_shape=jax.ShapeDtypeStruct((n_pad, OUT_WIDTH), jnp.float32),
        grid_spec=pltpu.PrefetchScalarGridSpec(
            num_scalar_prefetch=0,
            grid=grid,
            in_specs=in_specs,
            out_specs=pl.BlockSpec((tile, OUT_WIDTH), lambda i: (i, 0)),
        ),
        compiler_params=pltpu.CompilerParams(
            dimension_semantics=("parallel",),
            vmem_limit_bytes=40 * 1024 * 1024,             # v7x-safe (64 MiB total)
        ),
    )(inp, *weights, b_slab)

    rgb = out[:n, :RGB_DIM]
    sigma = out[:n, RGB_DIM]
    return rgb, sigma


# ------------------------- deterministic parameters ---------------------------
def make_params(key):
    """Original-layout (W, b) pairs for all linear layers (W:(in,out), b:(out,))."""
    shapes = []
    for j in range(POS_DEPTH):
        if j == 0:
            din = POS_INPUT
        elif j == SKIP_LAYER + 1:
            din = POS_WIDTH + POS_INPUT
        else:
            din = POS_WIDTH
        shapes.append((din, POS_WIDTH))
    shapes.append((POS_WIDTH, POS_WIDTH + DENSITY_DIM))     # feature_layer
    shapes.append((DIR_INPUT + POS_WIDTH, DIR_WIDTH))       # dir_layer
    shapes.append((DIR_WIDTH, RGB_DIM))                     # rgb_layer

    params = []
    for idx, (din, dout) in enumerate(shapes):
        kw, kb = jax.random.split(jax.random.fold_in(key, idx))
        scale = 1.0 / jnp.sqrt(jnp.float32(din))
        params.append(jax.random.uniform(kw, (din, dout), jnp.float32, -scale, scale))
        params.append(jax.random.uniform(kb, (dout,), jnp.float32, -scale, scale))
    return params


# --------------------------- pure-JAX reference -------------------------------
def nerf_reference(pos, dirs, params):
    p = pos
    for i in range(POS_DEPTH):
        w, b = params[2 * i], params[2 * i + 1]
        p = jnp.maximum(p @ w + b, 0.0)
        if i == SKIP_LAYER:
            p = jnp.concatenate([pos, p], axis=-1)
    wf, bf = params[2 * POS_DEPTH], params[2 * POS_DEPTH + 1]
    p = p @ wf + bf
    sigma = jnp.maximum(p[:, 0], 0.0)
    wd, bd = params[2 * POS_DEPTH + 2], params[2 * POS_DEPTH + 3]
    h = jnp.maximum(jnp.concatenate([p[:, 1:], dirs], axis=-1) @ wd + bd, 0.0)
    wr, br = params[2 * POS_DEPTH + 4], params[2 * POS_DEPTH + 5]
    rgb = jax.nn.sigmoid(h @ wr + br)
    return rgb, sigma


# --------------------------------- main ---------------------------------------
if __name__ == "__main__":
    key = jax.random.PRNGKey(0)
    k_pos, k_dir, k_par = jax.random.split(key, 3)
    params = make_params(k_par)
    packed = pack_params(params)

    # case 1: small N, not multiple of 8 -> exercises the tile-clamp / padding path
    # case 2: multi-step grid with a forced smaller tile -> exercises pipelining
    cases = [(300, TILE_N), (2500, 1024)]
    for n, tile_n in cases:
        kp = jax.random.fold_in(k_pos, n)
        kd = jax.random.fold_in(k_dir, n)
        pos = jax.random.normal(kp, (n, POS_INPUT), jnp.float32)
        dirs = jax.random.normal(kd, (n, DIR_INPUT), jnp.float32)

        rgb, sigma = nerf_forward(pos, dirs, packed, tile_n=tile_n)
        jax.block_until_ready((rgb, sigma))

        rgb_ref, sigma_ref = nerf_reference(pos, dirs, params)
        assert rgb.shape == (n, RGB_DIM) and sigma.shape == (n,)
        # bf16 MXU operands + f32 accumulation vs. a pure-f32 reference
        assert jnp.allclose(rgb, rgb_ref, atol=5e-2, rtol=5e-2)
        assert jnp.allclose(sigma, sigma_ref, atol=5e-2, rtol=5e-2)

    print("KERNEL_OK")
</pallas_src>

<mosaic_0001>
module attributes {stable_mosaic.version = 11 : i64} {
  func.func @_nerf_kernel(%arg0: i32, %arg1: memref<304x48xbf16, #tpu.memory_space<vmem>>, %arg2: memref<48x128xbf16, #tpu.memory_space<vmem>>, %arg3: memref<128x128xbf16, #tpu.memory_space<vmem>>, %arg4: memref<128x128xbf16, #tpu.memory_space<vmem>>, %arg5: memref<128x128xbf16, #tpu.memory_space<vmem>>, %arg6: memref<128x128xbf16, #tpu.memory_space<vmem>>, %arg7: memref<128x128xbf16, #tpu.memory_space<vmem>>, %arg8: memref<48x128xbf16, #tpu.memory_space<vmem>>, %arg9: memref<128x128xbf16, #tpu.memory_space<vmem>>, %arg10: memref<8x128xf32, #tpu.memory_space<vmem>>, %arg11: memref<304x4xf32, #tpu.memory_space<vmem>>) attributes {dimension_semantics = [#tpu.dimension_semantics<parallel>], iteration_bounds = array<i64: 1>, scalar_prefetch = 0 : i64, scratch_operands = 0 : i64, tpu.core_type = #tpu.core_type<tc>, window_params = [{transform_indices = @transform_0, window_bounds = array<i64: 304, 48>}, {pipeline_mode = #tpu.pipeline_mode<synchronous>, transform_indices = @transform_1, window_bounds = array<i64: 48, 128>}, {pipeline_mode = #tpu.pipeline_mode<synchronous>, transform_indices = @transform_2, window_bounds = array<i64: 128, 128>}, {pipeline_mode = #tpu.pipeline_mode<synchronous>, transform_indices = @transform_3, window_bounds = array<i64: 128, 128>}, {pipeline_mode = #tpu.pipeline_mode<synchronous>, transform_indices = @transform_4, window_bounds = array<i64: 128, 128>}, {pipeline_mode = #tpu.pipeline_mode<synchronous>, transform_indices = @transform_5, window_bounds = array<i64: 128, 128>}, {pipeline_mode = #tpu.pipeline_mode<synchronous>, transform_indices = @transform_6, window_bounds = array<i64: 128, 128>}, {pipeline_mode = #tpu.pipeline_mode<synchronous>, transform_indices = @transform_7, window_bounds = array<i64: 48, 128>}, {pipeline_mode = #tpu.pipeline_mode<synchronous>, transform_indices = @transform_8, window_bounds = array<i64: 128, 128>}, {pipeline_mode = #tpu.pipeline_mode<synchronous>, transform_indices = @transform_9, window_bounds = array<i64: 8, 128>}, {transform_indices = @transform_10, window_bounds = array<i64: 304, 4>}]} {
    %c0 = arith.constant 0 : index
    %c0_0 = arith.constant 0 : index
    %0 = vector.load %arg1[%c0, %c0_0] : memref<304x48xbf16, #tpu.memory_space<vmem>>, vector<304x48xbf16>
    %c0_1 = arith.constant 0 : index
    %c0_2 = arith.constant 0 : index
    %1 = vector.load %arg2[%c0_1, %c0_2] : memref<48x128xbf16, #tpu.memory_space<vmem>>, vector<48x128xbf16>
    %cst = arith.constant dense<0.000000e+00> : vector<304x128xf32>
    %2 = tpu.matmul %0, %1, %cst {dimension_numbers = #tpu.dot_dimension_numbers<[1], [0], [0], [1], [0, 0, 1, 1], [], []>} : vector<304x48xbf16>, vector<48x128xbf16>, vector<304x128xf32> -> vector<304x128xf32>
    %c0_3 = arith.constant 0 : index
    %c0_4 = arith.constant 0 : index
    %3 = vector.load %arg10[%c0_3, %c0_4] : memref<8x128xf32, #tpu.memory_space<vmem>>, vector<1x128xf32>
    %4 = vector.broadcast %3 : vector<1x128xf32> to vector<304x128xf32>
    %5 = arith.addf %2, %4 : vector<304x128xf32>
    %cst_5 = arith.constant 0.000000e+00 : f32
    %6 = vector.broadcast %cst_5 : f32 to vector<304x128xf32>
    %7 = arith.maximumf %5, %6 : vector<304x128xf32>
    %8 = arith.truncf %7 : vector<304x128xf32> to vector<304x128xbf16>
    %c0_6 = arith.constant 0 : index
    %c0_7 = arith.constant 0 : index
    %9 = vector.load %arg3[%c0_6, %c0_7] : memref<128x128xbf16, #tpu.memory_space<vmem>>, vector<128x128xbf16>
    %cst_8 = arith.constant dense<0.000000e+00> : vector<304x128xf32>
    %10 = tpu.matmul %8, %9, %cst_8 {dimension_numbers = #tpu.dot_dimension_numbers<[1], [0], [0], [1], [0, 0, 1, 1], [], []>} : vector<304x128xbf16>, vector<128x128xbf16>, vector<304x128xf32> -> vector<304x128xf32>
    %c1 = arith.constant 1 : index
    %c0_9 = arith.constant 0 : index
    %11 = vector.load %arg10[%c1, %c0_9] : memref<8x128xf32, #tpu.memory_space<vmem>>, vector<1x128xf32>
    %12 = vector.broadcast %11 : vector<1x128xf32> to vector<304x128xf32>
    %13 = arith.addf %10, %12 : vector<304x128xf32>
    %cst_10 = arith.constant 0.000000e+00 : f32
    %14 = vector.broadcast %cst_10 : f32 to vector<304x128xf32>
    %15 = arith.maximumf %13, %14 : vector<304x128xf32>
    %16 = arith.truncf %15 : vector<304x128xf32> to vector<304x128xbf16>
    %c0_11 = arith.constant 0 : index
    %c0_12 = arith.constant 0 : index
    %17 = vector.load %arg4[%c0_11, %c0_12] : memref<128x128xbf16, #tpu.memory_space<vmem>>, vector<128x128xbf16>
    %cst_13 = arith.constant dense<0.000000e+00> : vector<304x128xf32>
    %18 = tpu.matmul %16, %17, %cst_13 {dimension_numbers = #tpu.dot_dimension_numbers<[1], [0], [0], [1], [0, 0, 1, 1], [], []>} : vector<304x128xbf16>, vector<128x128xbf16>, vector<304x128xf32> -> vector<304x128xf32>
    %c2 = arith.constant 2 : index
    %c0_14 = arith.constant 0 : index
    %19 = vector.load %arg10[%c2, %c0_14] : memref<8x128xf32, #tpu.memory_space<vmem>>, vector<1x128xf32>
    %20 = vector.broadcast %19 : vector<1x128xf32> to vector<304x128xf32>
    %21 = arith.addf %18, %20 : vector<304x128xf32>
    %cst_15 = arith.constant 0.000000e+00 : f32
    %22 = vector.broadcast %cst_15 : f32 to vector<304x128xf32>
    %23 = arith.maximumf %21, %22 : vector<304x128xf32>
    %24 = arith.truncf %23 : vector<304x128xf32> to vector<304x128xbf16>
    %c0_16 = arith.constant 0 : index
    %c0_17 = arith.constant 0 : index
    %25 = vector.load %arg5[%c0_16, %c0_17] : memref<128x128xbf16, #tpu.memory_space<vmem>>, vector<128x128xbf16>
    %cst_18 = arith.constant dense<0.000000e+00> : vector<304x128xf32>
    %26 = tpu.matmul %24, %25, %cst_18 {dimension_numbers = #tpu.dot_dimension_numbers<[1], [0], [0], [1], [0, 0, 1, 1], [], []>} : vector<304x128xbf16>, vector<128x128xbf16>, vector<304x128xf32> -> vector<304x128xf32>
    %27 = arith.addf %26, %5 : vector<304x128xf32>
    %c3 = arith.constant 3 : index
    %c0_19 = arith.constant 0 : index
    %28 = vector.load %arg10[%c3, %c0_19] : memref<8x128xf32, #tpu.memory_space<vmem>>, vector<1x128xf32>
    %29 = vector.broadcast %28 : vector<1x128xf32> to vector<304x128xf32>
    %30 = arith.addf %27, %29 : vector<304x128xf32>
    %cst_20 = arith.constant 0.000000e+00 : f32
    %31 = vector.broadcast %cst_20 : f32 to vector<304x128xf32>
    %32 = arith.maximumf %30, %31 : vector<304x128xf32>
    %33 = arith.truncf %32 : vector<304x128xf32> to vector<304x128xbf16>
    %c0_21 = arith.constant 0 : index
    %c0_22 = arith.constant 0 : index
    %34 = vector.load %arg6[%c0_21, %c0_22] : memref<128x128xbf16, #tpu.memory_space<vmem>>, vector<128x128xbf16>
    %cst_23 = arith.constant dense<0.000000e+00> : vector<304x128xf32>
    %35 = tpu.matmul %33, %34, %cst_23 {dimension_numbers = #tpu.dot_dimension_numbers<[1], [0], [0], [1], [0, 0, 1, 1], [], []>} : vector<304x128xbf16>, vector<128x128xbf16>, vector<304x128xf32> -> vector<304x128xf32>
    %c4 = arith.constant 4 : index
    %c0_24 = arith.constant 0 : index
    %36 = vector.load %arg10[%c4, %c0_24] : memref<8x128xf32, #tpu.memory_space<vmem>>, vector<1x128xf32>
    %37 = vector.broadcast %36 : vector<1x128xf32> to vector<304x128xf32>
    %38 = arith.addf %35, %37 : vector<304x128xf32>
    %39 = arith.truncf %38 : vector<304x128xf32> to vector<304x128xbf16>
    %c0_25 = arith.constant 0 : index
    %c0_26 = arith.constant 0 : index
    %40 = vector.load %arg7[%c0_25, %c0_26] : memref<128x128xbf16, #tpu.memory_space<vmem>>, vector<128x128xbf16>
    %cst_27 = arith.constant dense<0.000000e+00> : vector<304x128xf32>
    %41 = tpu.matmul %39, %40, %cst_27 {dimension_numbers = #tpu.dot_dimension_numbers<[1], [0], [0], [1], [0, 0, 1, 1], [], []>} : vector<304x128xbf16>, vector<128x128xbf16>, vector<304x128xf32> -> vector<304x128xf32>
    %c0_28 = arith.constant 0 : index
    %c0_29 = arith.constant 0 : index
    %42 = vector.load %arg8[%c0_28, %c0_29] : memref<48x128xbf16, #tpu.memory_space<vmem>>, vector<48x128xbf16>
    %cst_30 = arith.constant dense<0.000000e+00> : vector<304x128xf32>
    %43 = tpu.matmul %0, %42, %cst_30 {dimension_numbers = #tpu.dot_dimension_numbers<[1], [0], [0], [1], [0, 0, 1, 1], [], []>} : vector<304x48xbf16>, vector<48x128xbf16>, vector<304x128xf32> -> vector<304x128xf32>
    %44 = arith.addf %41, %43 : vector<304x128xf32>
    %c5 = arith.constant 5 : index
    %c0_31 = arith.constant 0 : index
    %45 = vector.load %arg10[%c5, %c0_31] : memref<8x128xf32, #tpu.memory_space<vmem>>, vector<1x128xf32>
    %46 = vector.broadcast %45 : vector<1x128xf32> to vector<304x128xf32>
    %47 = arith.addf %44, %46 : vector<304x128xf32>
    %cst_32 = arith.constant 0.000000e+00 : f32
    %48 = vector.broadcast %cst_32 : f32 to vector<304x128xf32>
    %49 = arith.maximumf %47, %48 : vector<304x128xf32>
    %50 = arith.truncf %49 : vector<304x128xf32> to vector<304x128xbf16>
    %c0_33 = arith.constant 0 : index
    %c0_34 = arith.constant 0 : index
    %51 = vector.load %arg9[%c0_33, %c0_34] : memref<128x128xbf16, #tpu.memory_space<vmem>>, vector<128x128xbf16>
    %cst_35 = arith.constant dense<0.000000e+00> : vector<304x128xf32>
    %52 = tpu.matmul %50, %51, %cst_35 {dimension_numbers = #tpu.dot_dimension_numbers<[1], [0], [0], [1], [0, 0, 1, 1], [], []>} : vector<304x128xbf16>, vector<128x128xbf16>, vector<304x128xf32> -> vector<304x128xf32>
    %c6 = arith.constant 6 : index
    %c0_36 = arith.constant 0 : index
    %53 = vector.load %arg10[%c6, %c0_36] : memref<8x128xf32, #tpu.memory_space<vmem>>, vector<1x128xf32>
    %54 = vector.broadcast %53 : vector<1x128xf32> to vector<304x128xf32>
    %55 = arith.addf %52, %54 : vector<304x128xf32>
    %56 = vector.extract_strided_slice %55 {offsets = [0, 0], sizes = [304, 4], strides = [1, 1]} : vector<304x128xf32> to vector<304x4xf32>
    %57 = tpu.iota {dimensions = array<i32: 1>} : vector<304x4xi32>
    %c3_i32 = arith.constant 3 : i32
    %58 = vector.broadcast %c3_i32 : i32 to vector<304x4xi32>
    %59 = arith.cmpi slt, %57, %58 : vector<304x4xi32>
    %60 = arith.negf %56 : vector<304x4xf32>
    %61 = math.exp %60 : vector<304x4xf32>
    %cst_37 = arith.constant 1.000000e+00 : f32
    %62 = vector.broadcast %cst_37 : f32 to vector<304x4xf32>
    %63 = arith.addf %62, %61 : vector<304x4xf32>
    %64 = arith.divf %62, %63 : vector<304x4xf32>
    %cst_38 = arith.constant 0.000000e+00 : f32
    %65 = vector.broadcast %cst_38 : f32 to vector<304x4xf32>
    %66 = arith.maximumf %56, %65 : vector<304x4xf32>
    %67 = arith.select %59, %64, %66 : vector<304x4xi1>, vector<304x4xf32>
    %c0_39 = arith.constant 0 : index
    %c0_40 = arith.constant 0 : index
    %68 = vector.load %arg11[%c0_39, %c0_40] : memref<304x4xf32, #tpu.memory_space<vmem>>, vector<304x4xf32>
    tpu.vector_store %arg11[%c0_39, %c0_40], %67 {strides = array<i32>} : memref<304x4xf32, #tpu.memory_space<vmem>>, vector<304x4xf32>,
    return
  }
  func.func @transform_0(%arg0: i32) -> (i32, i32) {
    %c0_i32 = arith.constant 0 : i32
    %c0_i32_0 = arith.constant 0 : i32
    return %arg0, %c0_i32 : i32, i32
  }
  func.func @transform_1(%arg0: i32) -> (i32, i32) {
    %c0_i32 = arith.constant 0 : i32
    %c0_i32_0 = arith.constant 0 : i32
    %c0_i32_1 = arith.constant 0 : i32
    return %c0_i32, %c0_i32_0 : i32, i32
  }
  func.func @transform_2(%arg0: i32) -> (i32, i32) {
    %c0_i32 = arith.constant 0 : i32
    %c0_i32_0 = arith.constant 0 : i32
    %c0_i32_1 = arith.constant 0 : i32
    return %c0_i32, %c0_i32_0 : i32, i32
  }
  func.func @transform_3(%arg0: i32) -> (i32, i32) {
    %c0_i32 = arith.constant 0 : i32
    %c0_i32_0 = arith.constant 0 : i32
    %c0_i32_1 = arith.constant 0 : i32
    return %c0_i32, %c0_i32_0 : i32, i32
  }
  func.func @transform_4(%arg0: i32) -> (i32, i32) {
    %c0_i32 = arith.constant 0 : i32
    %c0_i32_0 = arith.constant 0 : i32
    %c0_i32_1 = arith.constant 0 : i32
    return %c0_i32, %c0_i32_0 : i32, i32
  }
  func.func @transform_5(%arg0: i32) -> (i32, i32) {
    %c0_i32 = arith.constant 0 : i32
    %c0_i32_0 = arith.constant 0 : i32
    %c0_i32_1 = arith.constant 0 : i32
    return %c0_i32, %c0_i32_0 : i32, i32
  }
  func.func @transform_6(%arg0: i32) -> (i32, i32) {
    %c0_i32 = arith.constant 0 : i32
    %c0_i32_0 = arith.constant 0 : i32
    %c0_i32_1 = arith.constant 0 : i32
    return %c0_i32, %c0_i32_0 : i32, i32
  }
  func.func @transform_7(%arg0: i32) -> (i32, i32) {
    %c0_i32 = arith.constant 0 : i32
    %c0_i32_0 = arith.constant 0 : i32
    %c0_i32_1 = arith.constant 0 : i32
    return %c0_i32, %c0_i32_0 : i32, i32
  }
  func.func @transform_8(%arg0: i32) -> (i32, i32) {
    %c0_i32 = arith.constant 0 : i32
    %c0_i32_0 = arith.constant 0 : i32
    %c0_i32_1 = arith.constant 0 : i32
    return %c0_i32, %c0_i32_0 : i32, i32
  }
  func.func @transform_9(%arg0: i32) -> (i32, i32) {
    %c0_i32 = arith.constant 0 : i32
    %c0_i32_0 = arith.constant 0 : i32
    %c0_i32_1 = arith.constant 0 : i32
    return %c0_i32, %c0_i32_0 : i32, i32
  }
  func.func @transform_10(%arg0: i32) -> (i32, i32) {
    %c0_i32 = arith.constant 0 : i32
    %c0_i32_0 = arith.constant 0 : i32
    return %arg0, %c0_i32 : i32, i32
  }
}

</mosaic_0001>

<llo_original>
// kernel: tpu_custom_call.1
$region0: #{tpu_custom_call.1}
  #allocation0 [shape = 'u32[]', space=smem, size = 0x4, offset = 0x4, fixed_abs, tag = 'smem constant byte address 0x4 - core index']
  #allocation1 [shape = 'u32[72,128]{1,0:T(1,128)}', space=vmem, size = 0x9000, scoped, tag = 'internal scratch']
  %s0 = inlined_call_operand.vmem [shape: bf16[304,48], index: 0, kind: input, shape index: {}]
  %s1 = inlined_call_operand.vmem [shape: bf16[48,128], index: 1, kind: input, shape index: {}]
  %s2 = inlined_call_operand.vmem [shape: bf16[128,128], index: 2, kind: input, shape index: {}]
  %s3 = inlined_call_operand.vmem [shape: bf16[128,128], index: 3, kind: input, shape index: {}]
  %s4 = inlined_call_operand.vmem [shape: bf16[128,128], index: 4, kind: input, shape index: {}]
  %s5 = inlined_call_operand.hbm [shape: bf16[128,128], index: 5, kind: input, shape index: {}]
  %s6 = inlined_call_operand.hbm [shape: bf16[128,128], index: 6, kind: input, shape index: {}]
  %s7 = inlined_call_operand.hbm [shape: bf16[48,128], index: 7, kind: input, shape index: {}]
  %s8 = inlined_call_operand.hbm [shape: bf16[128,128], index: 8, kind: input, shape index: {}]
  %s9 = inlined_call_operand.vmem [shape: f32[8,128], index: 9, kind: input, shape index: {}]
  %s10 = inlined_call_operand.vmem [shape: f32[304,4], index: 10, kind: output, shape index: {}]
  %s11 = sld [smem:[#allocation0]]
  $region66: #{tpu_custom_call.1} parent=0
    _
  %s13 = ssub.s32 1, %s11
  %s14 = scalar_select 0, %s13, %s11
  $region1: #{tpu_custom_call.1} parent=0
    #allocation2 [shape = 'u8[32768]{0}', space=vmem, size = 0x8000, scoped, tag = 'input window, operand 5, single buffered']
    #allocation3 [shape = 's32[1]{0}', space=sflag, size = 0x4, scoped, tag = 'scoped memory for tpu_custom_call.1']
    #allocation4 [shape = 'u8[32768]{0}', space=vmem, size = 0x8000, scoped, tag = 'input window, operand 6, single buffered']
    #allocation5 [shape = 's32[1]{0}', space=sflag, size = 0x4, scoped, tag = 'scoped memory for tpu_custom_call.1']
    #allocation6 [shape = 'u8[12288]{0}', space=vmem, size = 0x3000, scoped, tag = 'input window, operand 7, single buffered']
    #allocation7 [shape = 'u8[32768]{0}', space=vmem, size = 0x8000, scoped, tag = 'input window, operand 8, single buffered']
    #allocation8 [shape = 's32[1]{0}', space=sflag, size = 0x4, scoped, tag = 'scoped memory for tpu_custom_call.1']
    %15 = vsyncpa [#allocation3], 0
    %16 = vsyncpa [#allocation5], 0
    %17 = vsyncpa [#allocation8], 0
    // Predicated region
    $region2: #{tpu_custom_call.1} parent=1 // pred_check
      _
    $region3: #{tpu_custom_call.1} parent=1 // pred_check_branch
      %19 = sbr.rel (0) target = $region5
    $region4: #{tpu_custom_call.1} parent=1 // pred_region
      _
    $region5: #{tpu_custom_call.1} parent=1 // pred_fallthru
      _
    // Predicated region
    $region6: #{tpu_custom_call.1} parent=1 // pred_check
      _
    $region7: #{tpu_custom_call.1} parent=1 // pred_check_branch
      %21 = sbr.rel (0) target = $region9
    $region8: #{tpu_custom_call.1} parent=1 // pred_region
      _
    $region9: #{tpu_custom_call.1} parent=1 // pred_fallthru
      _
    // Predicated region
    $region10: #{tpu_custom_call.1} parent=1 // pred_check
      _
    $region11: #{tpu_custom_call.1} parent=1 // pred_check_branch
      %23 = sbr.rel (0) target = $region13
    $region12: #{tpu_custom_call.1} parent=1 // pred_region
      _
    $region13: #{tpu_custom_call.1} parent=1 // pred_fallthru
      _
    // Predicated region
    $region14: #{tpu_custom_call.1} parent=1 // pred_check
      _
    $region15: #{tpu_custom_call.1} parent=1 // pred_check_branch
      %25 = sbr.rel (0) target = $region17
    $region16: #{tpu_custom_call.1} parent=1 // pred_region
      _
    $region17: #{tpu_custom_call.1} parent=1 // pred_fallthru
      _
    // Predicated region
    $region18: #{tpu_custom_call.1} parent=1 // pred_check
      _
    $region19: #{tpu_custom_call.1} parent=1 // pred_check_branch
      %27 = sbr.rel (0) target = $region21
    $region20: #{tpu_custom_call.1} parent=1 // pred_region
      _
    $region21: #{tpu_custom_call.1} parent=1 // pred_fallthru
      _
    // Predicated region
    $region22: #{tpu_custom_call.1} parent=1 // pred_check
      _
    $region23: #{tpu_custom_call.1} parent=1 // pred_check_branch
      %29 = sbr.rel (0) target = $region25
    $region24: #{tpu_custom_call.1} parent=1 // pred_region
      %31 = vsyncadd [#allocation3], 0
      %s32 = sshll.u32 %s5, 4
      %s33 = int_to_ptr.hbm [resolvable:$true] %s32
      %s34 = sshll.u32 [#allocation2], 4
      %s35 = int_to_ptr.vmem [resolvable:$true] %s34
      %40 = dma.hbm_to_vmem [thread:$0]  %s33, 1024, %s35, [#allocation3], 64, 64, 4
    $region25: #{tpu_custom_call.1} parent=1 // pred_fallthru
      _
    // Predicated region
    $region26: #{tpu_custom_call.1} parent=1 // pred_check
      _
    $region27: #{tpu_custom_call.1} parent=1 // pred_check_branch
      %42 = sbr.rel (0) target = $region29
    $region28: #{tpu_custom_call.1} parent=1 // pred_region
      %44 = vsyncadd [#allocation5], 0
      %s45 = sshll.u32 %s6, 4
      %s46 = int_to_ptr.hbm [resolvable:$true] %s45
      %s47 = sshll.u32 [#allocation4], 4
      %s48 = int_to_ptr.vmem [resolvable:$true] %s47
      %53 = dma.hbm_to_vmem [thread:$0]  %s46, 1024, %s48, [#allocation5], 64, 64, 4
    $region29: #{tpu_custom_call.1} parent=1 // pred_fallthru
      _
    // Predicated region
    $region30: #{tpu_custom_call.1} parent=1 // pred_check
      _
    $region31: #{tpu_custom_call.1} parent=1 // pred_check_branch
      %55 = sbr.rel (0) target = $region33
    $region32: #{tpu_custom_call.1} parent=1 // pred_region
      %57 = vsyncadd [#allocation5], 0
      %s58 = sshll.u32 %s7, 4
      %s59 = int_to_ptr.hbm [resolvable:$true] %s58
      %s60 = sshll.u32 [#allocation6], 4
      %s61 = int_to_ptr.vmem [resolvable:$true] %s60
      %66 = dma.hbm_to_vmem [thread:$0]  %s59, 384, %s61, [#allocation5], 64, 64, 4
    $region33: #{tpu_custom_call.1} parent=1 // pred_fallthru
      _
    // Predicated region
    $region34: #{tpu_custom_call.1} parent=1 // pred_check
      _
    $region35: #{tpu_custom_call.1} parent=1 // pred_check_branch
      %68 = sbr.rel (0) target = $region37
    $region36: #{tpu_custom_call.1} parent=1 // pred_region
      %70 = vsyncadd [#allocation8], 0
      %s71 = sshll.u32 %s8, 4
      %s72 = int_to_ptr.hbm [resolvable:$true] %s71
      %s73 = sshll.u32 [#allocation7], 4
      %s74 = int_to_ptr.vmem [resolvable:$true] %s73
      %79 = dma.hbm_to_vmem [thread:$0]  %s72, 1024, %s74, [#allocation8], 64, 64, 4
    $region37: #{tpu_custom_call.1} parent=1 // pred_fallthru
      _
    // Predicated region
    $region38: #{tpu_custom_call.1} parent=1 // pred_check
      _
    $region39: #{tpu_custom_call.1} parent=1 // pred_check_branch
      %81 = sbr.rel (0) target = $region41
    $region40: #{tpu_custom_call.1} parent=1 // pred_region
      _
    $region41: #{tpu_custom_call.1} parent=1 // pred_fallthru
      _
    // Predicated region
    $region42: #{tpu_custom_call.1} parent=1 // pred_check
      _
    $region43: #{tpu_custom_call.1} parent=1 // pred_check_branch
      %83 = sbr.rel (0) target = $region45
    $region44: #{tpu_custom_call.1} parent=1 // pred_region
      %85 = dma.done [#allocation3], 1024
    $region45: #{tpu_custom_call.1} parent=1 // pred_fallthru
      _
    // Predicated region
    $region46: #{tpu_custom_call.1} parent=1 // pred_check
      _
    $region47: #{tpu_custom_call.1} parent=1 // pred_check_branch
      %87 = sbr.rel (0) target = $region49
    $region48: #{tpu_custom_call.1} parent=1 // pred_region
      %89 = dma.done [#allocation5], 1024
    $region49: #{tpu_custom_call.1} parent=1 // pred_fallthru
      _
    // Predicated region
    $region50: #{tpu_custom_call.1} parent=1 // pred_check
      _
    $region51: #{tpu_custom_call.1} parent=1 // pred_check_branch
      %91 = sbr.rel (0) target = $region53
    $region52: #{tpu_custom_call.1} parent=1 // pred_region
      %93 = dma.done [#allocation5], 384
    $region53: #{tpu_custom_call.1} parent=1 // pred_fallthru
      _
    // Predicated region
    $region54: #{tpu_custom_call.1} parent=1 // pred_check
      _
    $region55: #{tpu_custom_call.1} parent=1 // pred_check_branch
      %95 = sbr.rel (0) target = $region57
    $region56: #{tpu_custom_call.1} parent=1 // pred_region
      %97 = dma.done [#allocation8], 1024
    $region57: #{tpu_custom_call.1} parent=1 // pred_fallthru
      _
    %v99 = vld [vmem:[%s0] sm:$0xf]
    %v100 = vld [vmem:[%s0 + $0x4] sm:$0xf]
    %v101 = vld [vmem:[%s0 + $0x8] sm:$0xf]
    %v102 = vld [vmem:[%s0 + $0xc] sm:$0xf]
    %v103 = vld [vmem:[%s0 + $0x10] sm:$0xf]
    %v104 = vld [vmem:[%s0 + $0x14] sm:$0xf]
    %v105 = vld [vmem:[%s0 + $0x18] sm:$0xf]
    %v106 = vld [vmem:[%s0 + $0x1c] sm:$0xf]
    %v107 = vld [vmem:[%s0 + $0x20] sm:$0xf]
    %v108 = vld [vmem:[%s0 + $0x24] sm:$0xf]
    %v109 = vld [vmem:[%s0 + $0x28] sm:$0xf]
    %v110 = vld [vmem:[%s0 + $0x2c] sm:$0xf]
    %v111 = vld [vmem:[%s0 + $0x30] sm:$0xf]
    %v112 = vld [vmem:[%s0 + $0x34] sm:$0xf]
    %v113 = vld [vmem:[%s0 + $0x38] sm:$0xf]
    %v114 = vld [vmem:[%s0 + $0x3c] sm:$0xf]
    %v115 = vld [vmem:[%s0 + $0x40] sm:$0xf]
    %v116 = vld [vmem:[%s0 + $0x44] sm:$0xf]
    %v117 = vld [vmem:[%s0 + $0x48] sm:$0xf]
    %v118 = vld [vmem:[%s0 + $0x4c] sm:$0xf]
    %v119 = vld [vmem:[%s0 + $0x50] sm:$0xf]
    %v120 = vld [vmem:[%s0 + $0x54] sm:$0xf]
    %v121 = vld [vmem:[%s0 + $0x58] sm:$0xf]
    %v122 = vld [vmem:[%s0 + $0x5c] sm:$0xf]
    %v123 = vld [vmem:[%s0 + $0x60] sm:$0xf]
    %v124 = vld [vmem:[%s0 + $0x64] sm:$0xf]
    %v125 = vld [vmem:[%s0 + $0x68] sm:$0xf]
    %v126 = vld [vmem:[%s0 + $0x6c] sm:$0xf]
    %v127 = vld [vmem:[%s0 + $0x70] sm:$0xf]
    %v128 = vld [vmem:[%s0 + $0x74] sm:$0xf]
    %v129 = vld [vmem:[%s0 + $0x78] sm:$0xf]
    %v130 = vld [vmem:[%s0 + $0x7c] sm:$0xf]
    %v131 = vld [vmem:[%s0 + $0x80] sm:$0xf]
    %v132 = vld [vmem:[%s0 + $0x84] sm:$0xf]
    %v133 = vld [vmem:[%s0 + $0x88] sm:$0xf]
    %v134 = vld [vmem:[%s0 + $0x8c] sm:$0xf]
    %v135 = vld [vmem:[%s0 + $0x90] sm:$0xf]
    %v136 = vld [vmem:[%s0 + $0x94] sm:$0xf]
    %v137 = vld [vmem:[%s1] sm:$0xf]
    %v138 = vld [vmem:[%s1 + $0x4] sm:$0xf]
    %v139 = vld [vmem:[%s1 + $0x8] sm:$0xf]
    %v140 = vld [vmem:[%s1 + $0xc] sm:$0xf]
    %v141 = vld [vmem:[%s1 + $0x10] sm:$0xf]
    %v142 = vld [vmem:[%s1 + $0x14] sm:$0xf]
    %v143 = vld [vmem:[%s9] sm:$0x1]
    %v144 = vperm.slane %v143, 0
    %v183 = vunpack.c.l.b16 %v99
    %v184 = vunpack.c.l.b16 %v100
    %v185 = vunpack.c.l.b16 %v101
    %v186 = vunpack.c.l.b16 %v102
    %v187 = vunpack.c.l.b16 %v103
    %v188 = vunpack.c.l.b16 %v104
    %v189 = vunpack.c.l.b16 %v105
    %v190 = vunpack.c.l.b16 %v106
    %v191 = vunpack.c.l.b16 %v107
    %v192 = vunpack.c.l.b16 %v108
    %v193 = vunpack.c.l.b16 %v109
    %v194 = vunpack.c.l.b16 %v110
    %v195 = vunpack.c.l.b16 %v111
    %v196 = vunpack.c.l.b16 %v112
    %v197 = vunpack.c.l.b16 %v113
    %v198 = vunpack.c.l.b16 %v114
    %v199 = vunpack.c.l.b16 %v115
    %v200 = vunpack.c.l.b16 %v116
    %v201 = vunpack.c.l.b16 %v117
    %v202 = vunpack.c.l.b16 %v118
    %v203 = vunpack.c.l.b16 %v119
    %v204 = vunpack.c.l.b16 %v120
    %v205 = vunpack.c.l.b16 %v121
    %v206 = vunpack.c.l.b16 %v122
    %v207 = vunpack.c.l.b16 %v123
    %v208 = vunpack.c.l.b16 %v124
    %v209 = vunpack.c.l.b16 %v125
    %v210 = vunpack.c.l.b16 %v126
    %v211 = vunpack.c.l.b16 %v127
    %v212 = vunpack.c.l.b16 %v128
    %v213 = vunpack.c.l.b16 %v129
    %v214 = vunpack.c.l.b16 %v130
    %v215 = vunpack.c.l.b16 %v131
    %v216 = vunpack.c.l.b16 %v132
    %v217 = vunpack.c.l.b16 %v133
    %v218 = vunpack.c.l.b16 %v134
    %v219 = vunpack.c.l.b16 %v135
    %v220 = vunpack.c.l.b16 %v136
    %v221 = vpack.c.b16 %v184, %v183
    %v222 = vpack.c.b16 %v186, %v185
    %v223 = vpack.c.b16 %v188, %v187
    %v224 = vpack.c.b16 %v190, %v189
    %v225 = vpack.c.b16 %v192, %v191
    %v226 = vpack.c.b16 %v194, %v193
    %v227 = vpack.c.b16 %v196, %v195
    %v228 = vpack.c.b16 %v198, %v197
    %v229 = vpack.c.b16 %v200, %v199
    %v230 = vpack.c.b16 %v202, %v201
    %v231 = vpack.c.b16 %v204, %v203
    %v232 = vpack.c.b16 %v206, %v205
    %v233 = vpack.c.b16 %v208, %v207
    %v234 = vpack.c.b16 %v210, %v209
    %v235 = vpack.c.b16 %v212, %v211
    %v236 = vpack.c.b16 %v214, %v213
    %v237 = vpack.c.b16 %v216, %v215
    %v238 = vpack.c.b16 %v218, %v217
    %v239 = vpack.c.b16 %v220, %v219
    %v246 = vunpack.c.l.b16 %v137
    %v247 = vunpack.c.l.b16 %v138
    %v248 = vunpack.c.l.b16 %v139
    %v249 = vunpack.c.l.b16 %v140
    %v250 = vunpack.c.l.b16 %v141
    %v251 = vunpack.c.l.b16 %v142
    %v252 = vpack.c.b16 %v247, %v246
    %v253 = vpack.c.b16 %v249, %v248
    %v254 = vpack.c.b16 %v251, %v250
    %vm258 = vcmask 392192
    %v260 = vsel %vm258, %v221, 0
    %v263 = vsel %vm258, %v222, 0
    %v266 = vsel %vm258, %v223, 0
    %v269 = vsel %vm258, %v224, 0
    %v272 = vsel %vm258, %v225, 0
    %v275 = vsel %vm258, %v226, 0
    %v278 = vsel %vm258, %v227, 0
    %v281 = vsel %vm258, %v228, 0
    %v284 = vsel %vm258, %v229, 0
    %v287 = vsel %vm258, %v230, 0
    %v290 = vsel %vm258, %v231, 0
    %v293 = vsel %vm258, %v232, 0
    %v296 = vsel %vm258, %v233, 0
    %v299 = vsel %vm258, %v234, 0
    %v302 = vsel %vm258, %v235, 0
    %v305 = vsel %vm258, %v236, 0
    %v308 = vsel %vm258, %v237, 0
    %v311 = vsel %vm258, %v238, 0
    %v314 = vsel %vm258, %v239, 0
    %316 = vmatpush.bf16.msra.mxu0 0
    %317 = vmatpush.bf16.msra.mxu0 0
    %318 = vmatpush.bf16.msra.mxu0 0
    %319 = vmatpush.bf16.msra.mxu0 0
    %320 = vmatpush.bf16.msra.mxu0 0
    %321 = vmatpush.bf16.msra.mxu0 %v254
    %322 = vmatpush.bf16.msra.mxu0 %v253
    %323 = vmatpush.bf16.msra.mxu0 %v252
    %324 = vmatmul.bf16.gmra.mxu0 %v260
    %v325 = vpop.f32.mrf.mxu0
    %v326 = vadd.f32 %v144, %v325
    %v327 = vpop.f32.mrf.mxu0
    %v328 = vadd.f32 %v144, %v327
    %329 = vmatmul.bf16.gmra.mxu0 %v263
    %v330 = vpop.f32.mrf.mxu0
    %v331 = vadd.f32 %v144, %v330
    %v332 = vpop.f32.mrf.mxu0
    %v333 = vadd.f32 %v144, %v332
    %334 = vmatmul.bf16.gmra.mxu0 %v266
    %v335 = vpop.f32.mrf.mxu0
    %v336 = vadd.f32 %v144, %v335
    %v337 = vpop.f32.mrf.mxu0
    %v338 = vadd.f32 %v144, %v337
    %339 = vmatmul.bf16.gmra.mxu0 %v269
    %v340 = vpop.f32.mrf.mxu0
    %v341 = vadd.f32 %v144, %v340
    %v342 = vpop.f32.mrf.mxu0
    %v343 = vadd.f32 %v144, %v342
    %344 = vmatmul.bf16.gmra.mxu0 %v272
    %v345 = vpop.f32.mrf.mxu0
    %v346 = vadd.f32 %v144, %v345
    %v347 = vpop.f32.mrf.mxu0
    %v348 = vadd.f32 %v144, %v347
    %349 = vmatmul.bf16.gmra.mxu0 %v275
    %v350 = vpop.f32.mrf.mxu0
    %v351 = vadd.f32 %v144, %v350
    %v352 = vpop.f32.mrf.mxu0
    %v353 = vadd.f32 %v144, %v352
    %354 = vmatmul.bf16.gmra.mxu0 %v278
    %v355 = vpop.f32.mrf.mxu0
    %v356 = vadd.f32 %v144, %v355
    %v357 = vpop.f32.mrf.mxu0
    %v358 = vadd.f32 %v144, %v357
    %359 = vmatmul.bf16.gmra.mxu0 %v281
    %v360 = vpop.f32.mrf.mxu0
    %v361 = vadd.f32 %v144, %v360
    %v362 = vpop.f32.mrf.mxu0
    %v363 = vadd.f32 %v144, %v362
    %364 = vmatmul.bf16.gmra.mxu0 %v284
    %v365 = vpop.f32.mrf.mxu0
    %v366 = vadd.f32 %v144, %v365
    %v367 = vpop.f32.mrf.mxu0
    %v368 = vadd.f32 %v144, %v367
    %369 = vmatmul.bf16.gmra.mxu0 %v287
    %v370 = vpop.f32.mrf.mxu0
    %v371 = vadd.f32 %v144, %v370
    %v372 = vpop.f32.mrf.mxu0
    %v373 = vadd.f32 %v144, %v372
    %374 = vmatmul.bf16.gmra.mxu0 %v290
    %v375 = vpop.f32.mrf.mxu0
    %v376 = vadd.f32 %v144, %v375
    %v377 = vpop.f32.mrf.mxu0
    %v378 = vadd.f32 %v144, %v377
    %379 = vmatmul.bf16.gmra.mxu0 %v293
    %v380 = vpop.f32.mrf.mxu0
    %v381 = vadd.f32 %v144, %v380
    %v382 = vpop.f32.mrf.mxu0
    %v383 = vadd.f32 %v144, %v382
    %384 = vmatmul.bf16.gmra.mxu0 %v296
    %v385 = vpop.f32.mrf.mxu0
    %v386 = vadd.f32 %v144, %v385
    %v387 = vpop.f32.mrf.mxu0
    %v388 = vadd.f32 %v144, %v387
    %389 = vmatmul.bf16.gmra.mxu0 %v299
    %v390 = vpop.f32.mrf.mxu0
    %v391 = vadd.f32 %v144, %v390
    %v392 = vpop.f32.mrf.mxu0
    %v393 = vadd.f32 %v144, %v392
    %394 = vmatmul.bf16.gmra.mxu0 %v302
    %v395 = vpop.f32.mrf.mxu0
    %v396 = vadd.f32 %v144, %v395
    %v397 = vpop.f32.mrf.mxu0
    %v398 = vadd.f32 %v144, %v397
    %399 = vmatmul.bf16.gmra.mxu0 %v305
    %v400 = vpop.f32.mrf.mxu0
    %v401 = vadd.f32 %v144, %v400
    %v402 = vpop.f32.mrf.mxu0
    %v403 = vadd.f32 %v144, %v402
    %404 = vmatmul.bf16.gmra.mxu0 %v308
    %v405 = vpop.f32.mrf.mxu0
    %v406 = vadd.f32 %v144, %v405
    %v407 = vpop.f32.mrf.mxu0
    %v408 = vadd.f32 %v144, %v407
    %409 = vmatmul.bf16.gmra.mxu0 %v311
    %v410 = vpop.f32.mrf.mxu0
    %v411 = vadd.f32 %v144, %v410
    %v412 = vpop.f32.mrf.mxu0
    %v413 = vadd.f32 %v144, %v412
    %414 = vmatmul.bf16.gmra.mxu0 %v314
    %v415 = vpop.f32.mrf.mxu0
    %v416 = vadd.f32 %v144, %v415
    %v417 = vpop.f32.mrf.mxu0
    %v418 = vadd.f32 %v144, %v417
    %419 = vdwg.mxu0
    %v420 = vmax.f32 %v326, 0.0
    %v421 = vmax.f32 %v328, 0.0
    %v422 = vmax.f32 %v331, 0.0
    %v423 = vmax.f32 %v333, 0.0
    %v424 = vmax.f32 %v336, 0.0
    %v425 = vmax.f32 %v338, 0.0
    %v426 = vmax.f32 %v341, 0.0
    %v427 = vmax.f32 %v343, 0.0
    %v428 = vmax.f32 %v346, 0.0
    %v429 = vmax.f32 %v348, 0.0
    %v430 = vmax.f32 %v351, 0.0
    %v431 = vmax.f32 %v353, 0.0
    %v432 = vmax.f32 %v356, 0.0
    %v433 = vmax.f32 %v358, 0.0
    %v434 = vmax.f32 %v361, 0.0
    %v435 = vmax.f32 %v363, 0.0
    %v436 = vmax.f32 %v366, 0.0
    %v437 = vmax.f32 %v368, 0.0
    %v438 = vmax.f32 %v371, 0.0
    %v439 = vmax.f32 %v373, 0.0
    %v440 = vmax.f32 %v376, 0.0
    %v441 = vmax.f32 %v378, 0.0
    %v442 = vmax.f32 %v381, 0.0
    %v443 = vmax.f32 %v383, 0.0
    %v444 = vmax.f32 %v386, 0.0
    %v445 = vmax.f32 %v388, 0.0
    %v446 = vmax.f32 %v391, 0.0
    %v447 = vmax.f32 %v393, 0.0
    %v448 = vmax.f32 %v396, 0.0
    %v449 = vmax.f32 %v398, 0.0
    %v450 = vmax.f32 %v401, 0.0
    %v451 = vmax.f32 %v403, 0.0
    %v452 = vmax.f32 %v406, 0.0
    %v453 = vmax.f32 %v408, 0.0
    %v454 = vmax.f32 %v411, 0.0
    %v455 = vmax.f32 %v413, 0.0
    %v456 = vmax.f32 %v416, 0.0
    %v457 = vmax.f32 %v418, 0.0
    %v458 = vpack.c.bf16 %v421, %v420
    %v459 = vpack.c.bf16 %v423, %v422
    %v460 = vpack.c.bf16 %v425, %v424
    %v461 = vpack.c.bf16 %v427, %v426
    %v462 = vpack.c.bf16 %v429, %v428
    %v463 = vpack.c.bf16 %v431, %v430
    %v464 = vpack.c.bf16 %v433, %v432
    %v465 = vpack.c.bf16 %v435, %v434
    %v466 = vpack.c.bf16 %v437, %v436
    %v467 = vpack.c.bf16 %v439, %v438
    %v468 = vpack.c.bf16 %v441, %v440
    %v469 = vpack.c.bf16 %v443, %v442
    %v470 = vpack.c.bf16 %v445, %v444
    %v471 = vpack.c.bf16 %v447, %v446
    %v472 = vpack.c.bf16 %v449, %v448
    %v473 = vpack.c.bf16 %v451, %v450
    %v474 = vpack.c.bf16 %v453, %v452
    %v475 = vpack.c.bf16 %v455, %v454
    %v476 = vpack.c.bf16 %v457, %v456
    %v477 = vld [vmem:[%s2] sm:$0xf]
    %v478 = vld [vmem:[%s2 + $0x4] sm:$0xf]
    %v479 = vld [vmem:[%s2 + $0x8] sm:$0xf]
    %v480 = vld [vmem:[%s2 + $0xc] sm:$0xf]
    %v481 = vld [vmem:[%s2 + $0x10] sm:$0xf]
    %v482 = vld [vmem:[%s2 + $0x14] sm:$0xf]
    %v483 = vld [vmem:[%s2 + $0x18] sm:$0xf]
    %v484 = vld [vmem:[%s2 + $0x1c] sm:$0xf]
    %v485 = vld [vmem:[%s2 + $0x20] sm:$0xf]
    %v486 = vld [vmem:[%s2 + $0x24] sm:$0xf]
    %v487 = vld [vmem:[%s2 + $0x28] sm:$0xf]
    %v488 = vld [vmem:[%s2 + $0x2c] sm:$0xf]
    %v489 = vld [vmem:[%s2 + $0x30] sm:$0xf]
    %v490 = vld [vmem:[%s2 + $0x34] sm:$0xf]
    %v491 = vld [vmem:[%s2 + $0x38] sm:$0xf]
    %v492 = vld [vmem:[%s2 + $0x3c] sm:$0xf]
    %v493 = vld [vmem:[%s9 + $0x1] sm:$0x1]
    %v494 = vperm.slane %v493, 0
    %v511 = vunpack.c.l.b16 %v477
    %v512 = vunpack.c.l.b16 %v478
    %v513 = vunpack.c.l.b16 %v479
    %v514 = vunpack.c.l.b16 %v480
    %v515 = vunpack.c.l.b16 %v481
    %v516 = vunpack.c.l.b16 %v482
    %v517 = vunpack.c.l.b16 %v483
    %v518 = vunpack.c.l.b16 %v484
    %v519 = vunpack.c.l.b16 %v485
    %v520 = vunpack.c.l.b16 %v486
    %v521 = vunpack.c.l.b16 %v487
    %v522 = vunpack.c.l.b16 %v488
    %v523 = vunpack.c.l.b16 %v489
    %v524 = vunpack.c.l.b16 %v490
    %v525 = vunpack.c.l.b16 %v491
    %v526 = vunpack.c.l.b16 %v492
    %v527 = vpack.c.b16 %v512, %v511
    %v528 = vpack.c.b16 %v514, %v513
    %v529 = vpack.c.b16 %v516, %v515
    %v530 = vpack.c.b16 %v518, %v517
    %v531 = vpack.c.b16 %v520, %v519
    %v532 = vpack.c.b16 %v522, %v521
    %v533 = vpack.c.b16 %v524, %v523
    %v534 = vpack.c.b16 %v526, %v525
    %543 = vmatpush.bf16.msra.mxu0 %v534
    %544 = vmatpush.bf16.msra.mxu0 %v533
    %545 = vmatpush.bf16.msra.mxu0 %v532
    %546 = vmatpush.bf16.msra.mxu0 %v531
    %547 = vmatpush.bf16.msra.mxu0 %v530
    %548 = vmatpush.bf16.msra.mxu0 %v529
    %549 = vmatpush.bf16.msra.mxu0 %v528
    %550 = vmatpush.bf16.msra.mxu0 %v527
    %551 = vmatmul.bf16.gmra.mxu0 %v458
    %v552 = vpop.f32.mrf.mxu0
    %v553 = vadd.f32 %v494, %v552
    %v554 = vpop.f32.mrf.mxu0
    %v555 = vadd.f32 %v494, %v554
    %556 = vmatmul.bf16.gmra.mxu0 %v459
    %v557 = vpop.f32.mrf.mxu0
    %v558 = vadd.f32 %v494, %v557
    %v559 = vpop.f32.mrf.mxu0
    %v560 = vadd.f32 %v494, %v559
    %561 = vmatmul.bf16.gmra.mxu0 %v460
    %v562 = vpop.f32.mrf.mxu0
    %v563 = vadd.f32 %v494, %v562
    %v564 = vpop.f32.mrf.mxu0
    %v565 = vadd.f32 %v494, %v564
    %566 = vmatmul.bf16.gmra.mxu0 %v461
    %v567 = vpop.f32.mrf.mxu0
    %v568 = vadd.f32 %v494, %v567
    %v569 = vpop.f32.mrf.mxu0
    %v570 = vadd.f32 %v494, %v569
    %571 = vmatmul.bf16.gmra.mxu0 %v462
    %v572 = vpop.f32.mrf.mxu0
    %v573 = vadd.f32 %v494, %v572
    %v574 = vpop.f32.mrf.mxu0
    %v575 = vadd.f32 %v494, %v574
    %576 = vmatmul.bf16.gmra.mxu0 %v463
    %v577 = vpop.f32.mrf.mxu0
    %v578 = vadd.f32 %v494, %v577
    %v579 = vpop.f32.mrf.mxu0
    %v580 = vadd.f32 %v494, %v579
    %581 = vmatmul.bf16.gmra.mxu0 %v464
    %v582 = vpop.f32.mrf.mxu0
    %v583 = vadd.f32 %v494, %v582
    %v584 = vpop.f32.mrf.mxu0
    %v585 = vadd.f32 %v494, %v584
    %586 = vmatmul.bf16.gmra.mxu0 %v465
    %v587 = vpop.f32.mrf.mxu0
    %v588 = vadd.f32 %v494, %v587
    %v589 = vpop.f32.mrf.mxu0
    %v590 = vadd.f32 %v494, %v589
    %591 = vmatmul.bf16.gmra.mxu0 %v466
    %v592 = vpop.f32.mrf.mxu0
    %v593 = vadd.f32 %v494, %v592
    %v594 = vpop.f32.mrf.mxu0
    %v595 = vadd.f32 %v494, %v594
    %596 = vmatmul.bf16.gmra.mxu0 %v467
    %v597 = vpop.f32.mrf.mxu0
    %v598 = vadd.f32 %v494, %v597
    %v599 = vpop.f32.mrf.mxu0
    %v600 = vadd.f32 %v494, %v599
    %601 = vmatmul.bf16.gmra.mxu0 %v468
    %v602 = vpop.f32.mrf.mxu0
    %v603 = vadd.f32 %v494, %v602
    %v604 = vpop.f32.mrf.mxu0
    %v605 = vadd.f32 %v494, %v604
    %606 = vmatmul.bf16.gmra.mxu0 %v469
    %v607 = vpop.f32.mrf.mxu0
    %v608 = vadd.f32 %v494, %v607
    %v609 = vpop.f32.mrf.mxu0
    %v610 = vadd.f32 %v494, %v609
    %611 = vmatmul.bf16.gmra.mxu0 %v470
    %v612 = vpop.f32.mrf.mxu0
    %v613 = vadd.f32 %v494, %v612
    %v614 = vpop.f32.mrf.mxu0
    %v615 = vadd.f32 %v494, %v614
    %616 = vmatmul.bf16.gmra.mxu0 %v471
    %v617 = vpop.f32.mrf.mxu0
    %v618 = vadd.f32 %v494, %v617
    %v619 = vpop.f32.mrf.mxu0
    %v620 = vadd.f32 %v494, %v619
    %621 = vmatmul.bf16.gmra.mxu0 %v472
    %v622 = vpop.f32.mrf.mxu0
    %v623 = vadd.f32 %v494, %v622
    %v624 = vpop.f32.mrf.mxu0
    %v625 = vadd.f32 %v494, %v624
    %626 = vmatmul.bf16.gmra.mxu0 %v473
    %v627 = vpop.f32.mrf.mxu0
    %v628 = vadd.f32 %v494, %v627
    %v629 = vpop.f32.mrf.mxu0
    %v630 = vadd.f32 %v494, %v629
    %631 = vmatmul.bf16.gmra.mxu0 %v474
    %v632 = vpop.f32.mrf.mxu0
    %v633 = vadd.f32 %v494, %v632
    %v634 = vpop.f32.mrf.mxu0
    %v635 = vadd.f32 %v494, %v634
    %636 = vmatmul.bf16.gmra.mxu0 %v475
    %v637 = vpop.f32.mrf.mxu0
    %v638 = vadd.f32 %v494, %v637
    %v639 = vpop.f32.mrf.mxu0
    %v640 = vadd.f32 %v494, %v639
    %641 = vmatmul.bf16.gmra.mxu0 %v476
    %v642 = vpop.f32.mrf.mxu0
    %v643 = vadd.f32 %v494, %v642
    %v644 = vpop.f32.mrf.mxu0
    %v645 = vadd.f32 %v494, %v644
    %646 = vdwg.mxu0
    %v647 = vmax.f32 %v553, 0.0
    %v648 = vmax.f32 %v555, 0.0
    %v649 = vmax.f32 %v558, 0.0
    %v650 = vmax.f32 %v560, 0.0
    %v651 = vmax.f32 %v563, 0.0
    %v652 = vmax.f32 %v565, 0.0
    %v653 = vmax.f32 %v568, 0.0
    %v654 = vmax.f32 %v570, 0.0
    %v655 = vmax.f32 %v573, 0.0
    %v656 = vmax.f32 %v575, 0.0
    %v657 = vmax.f32 %v578, 0.0
    %v658 = vmax.f32 %v580, 0.0
    %v659 = vmax.f32 %v583, 0.0
    %v660 = vmax.f32 %v585, 0.0
    %v661 = vmax.f32 %v588, 0.0
    %v662 = vmax.f32 %v590, 0.0
    %v663 = vmax.f32 %v593, 0.0
    %v664 = vmax.f32 %v595, 0.0
    %v665 = vmax.f32 %v598, 0.0
    %v666 = vmax.f32 %v600, 0.0
    %v667 = vmax.f32 %v603, 0.0
    %v668 = vmax.f32 %v605, 0.0
    %v669 = vmax.f32 %v608, 0.0
    %v670 = vmax.f32 %v610, 0.0
    %v671 = vmax.f32 %v613, 0.0
    %v672 = vmax.f32 %v615, 0.0
    %v673 = vmax.f32 %v618, 0.0
    %v674 = vmax.f32 %v620, 0.0
    %v675 = vmax.f32 %v623, 0.0
    %v676 = vmax.f32 %v625, 0.0
    %v677 = vmax.f32 %v628, 0.0
    %v678 = vmax.f32 %v630, 0.0
    %v679 = vmax.f32 %v633, 0.0
    %v680 = vmax.f32 %v635, 0.0
    %v681 = vmax.f32 %v638, 0.0
    %v682 = vmax.f32 %v640, 0.0
    %v683 = vmax.f32 %v643, 0.0
    %v684 = vmax.f32 %v645, 0.0
    %v685 = vpack.c.bf16 %v648, %v647
    %v686 = vpack.c.bf16 %v650, %v649
    %v687 = vpack.c.bf16 %v652, %v651
    %v688 = vpack.c.bf16 %v654, %v653
    %v689 = vpack.c.bf16 %v656, %v655
    %v690 = vpack.c.bf16 %v658, %v657
    %v691 = vpack.c.bf16 %v660, %v659
    %v692 = vpack.c.bf16 %v662, %v661
    %v693 = vpack.c.bf16 %v664, %v663
    %v694 = vpack.c.bf16 %v666, %v665
    %v695 = vpack.c.bf16 %v668, %v667
    %v696 = vpack.c.bf16 %v670, %v669
    %v697 = vpack.c.bf16 %v672, %v671
    %v698 = vpack.c.bf16 %v674, %v673
    %v699 = vpack.c.bf16 %v676, %v675
    %v700 = vpack.c.bf16 %v678, %v677
    %v701 = vpack.c.bf16 %v680, %v679
    %v702 = vpack.c.bf16 %v682, %v681
    %v703 = vpack.c.bf16 %v684, %v683
    %v704 = vld [vmem:[%s3] sm:$0xf]
    %v705 = vld [vmem:[%s3 + $0x4] sm:$0xf]
    %v706 = vld [vmem:[%s3 + $0x8] sm:$0xf]
    %v707 = vld [vmem:[%s3 + $0xc] sm:$0xf]
    %v708 = vld [vmem:[%s3 + $0x10] sm:$0xf]
    %v709 = vld [vmem:[%s3 + $0x14] sm:$0xf]
    %v710 = vld [vmem:[%s3 + $0x18] sm:$0xf]
    %v711 = vld [vmem:[%s3 + $0x1c] sm:$0xf]
    %v712 = vld [vmem:[%s3 + $0x20] sm:$0xf]
    %v713 = vld [vmem:[%s3 + $0x24] sm:$0xf]
    %v714 = vld [vmem:[%s3 + $0x28] sm:$0xf]
    %v715 = vld [vmem:[%s3 + $0x2c] sm:$0xf]
    %v716 = vld [vmem:[%s3 + $0x30] sm:$0xf]
    %v717 = vld [vmem:[%s3 + $0x34] sm:$0xf]
    %v718 = vld [vmem:[%s3 + $0x38] sm:$0xf]
    %v719 = vld [vmem:[%s3 + $0x3c] sm:$0xf]
    %v720 = vld [vmem:[%s9 + $0x2] sm:$0x1]
    %v721 = vperm.slane %v720, 0
    %v738 = vunpack.c.l.b16 %v704
    %v739 = vunpack.c.l.b16 %v705
    %v740 = vunpack.c.l.b16 %v706
    %v741 = vunpack.c.l.b16 %v707
    %v742 = vunpack.c.l.b16 %v708
    %v743 = vunpack.c.l.b16 %v709
    %v744 = vunpack.c.l.b16 %v710
    %v745 = vunpack.c.l.b16 %v711
    %v746 = vunpack.c.l.b16 %v712
    %v747 = vunpack.c.l.b16 %v713
    %v748 = vunpack.c.l.b16 %v714
    %v749 = vunpack.c.l.b16 %v715
    %v750 = vunpack.c.l.b16 %v716
    %v751 = vunpack.c.l.b16 %v717
    %v752 = vunpack.c.l.b16 %v718
    %v753 = vunpack.c.l.b16 %v719
    %v754 = vpack.c.b16 %v739, %v738
    %v755 = vpack.c.b16 %v741, %v740
    %v756 = vpack.c.b16 %v743, %v742
    %v757 = vpack.c.b16 %v745, %v744
    %v758 = vpack.c.b16 %v747, %v746
    %v759 = vpack.c.b16 %v749, %v748
    %v760 = vpack.c.b16 %v751, %v750
    %v761 = vpack.c.b16 %v753, %v752
    %770 = vmatpush.bf16.msra.mxu0 %v761
    %771 = vmatpush.bf16.msra.mxu0 %v760
    %772 = vmatpush.bf16.msra.mxu0 %v759
    %773 = vmatpush.bf16.msra.mxu0 %v758
    %774 = vmatpush.bf16.msra.mxu0 %v757
    %775 = vmatpush.bf16.msra.mxu0 %v756
    %776 = vmatpush.bf16.msra.mxu0 %v755
    %777 = vmatpush.bf16.msra.mxu0 %v754
    %778 = vmatmul.bf16.gmra.mxu0 %v685
    %v779 = vpop.f32.mrf.mxu0
    %v780 = vadd.f32 %v721, %v779
    %v781 = vpop.f32.mrf.mxu0
    %v782 = vadd.f32 %v721, %v781
    %783 = vmatmul.bf16.gmra.mxu0 %v686
    %v784 = vpop.f32.mrf.mxu0
    %v785 = vadd.f32 %v721, %v784
    %v786 = vpop.f32.mrf.mxu0
    %v787 = vadd.f32 %v721, %v786
    %788 = vmatmul.bf16.gmra.mxu0 %v687
    %v789 = vpop.f32.mrf.mxu0
    %v790 = vadd.f32 %v721, %v789
    %v791 = vpop.f32.mrf.mxu0
    %v792 = vadd.f32 %v721, %v791
    %793 = vmatmul.bf16.gmra.mxu0 %v688
    %v794 = vpop.f32.mrf.mxu0
    %v795 = vadd.f32 %v721, %v794
    %v796 = vpop.f32.mrf.mxu0
    %v797 = vadd.f32 %v721, %v796
    %798 = vmatmul.bf16.gmra.mxu0 %v689
    %v799 = vpop.f32.mrf.mxu0
    %v800 = vadd.f32 %v721, %v799
    %v801 = vpop.f32.mrf.mxu0
    %v802 = vadd.f32 %v721, %v801
    %803 = vmatmul.bf16.gmra.mxu0 %v690
    %v804 = vpop.f32.mrf.mxu0
    %v805 = vadd.f32 %v721, %v804
    %v806 = vpop.f32.mrf.mxu0
    %v807 = vadd.f32 %v721, %v806
    %808 = vmatmul.bf16.gmra.mxu0 %v691
    %v809 = vpop.f32.mrf.mxu0
    %v810 = vadd.f32 %v721, %v809
    %v811 = vpop.f32.mrf.mxu0
    %v812 = vadd.f32 %v721, %v811
    %813 = vmatmul.bf16.gmra.mxu0 %v692
    %v814 = vpop.f32.mrf.mxu0
    %v815 = vadd.f32 %v721, %v814
    %v816 = vpop.f32.mrf.mxu0
    %v817 = vadd.f32 %v721, %v816
    %818 = vmatmul.bf16.gmra.mxu0 %v693
    %v819 = vpop.f32.mrf.mxu0
    %v820 = vadd.f32 %v721, %v819
    %v821 = vpop.f32.mrf.mxu0
    %v822 = vadd.f32 %v721, %v821
    %823 = vmatmul.bf16.gmra.mxu0 %v694
    %v824 = vpop.f32.mrf.mxu0
    %v825 = vadd.f32 %v721, %v824
    %v826 = vpop.f32.mrf.mxu0
    %v827 = vadd.f32 %v721, %v826
    %828 = vmatmul.bf16.gmra.mxu0 %v695
    %v829 = vpop.f32.mrf.mxu0
    %v830 = vadd.f32 %v721, %v829
    %v831 = vpop.f32.mrf.mxu0
    %v832 = vadd.f32 %v721, %v831
    %833 = vmatmul.bf16.gmra.mxu0 %v696
    %v834 = vpop.f32.mrf.mxu0
    %v835 = vadd.f32 %v721, %v834
    %v836 = vpop.f32.mrf.mxu0
    %v837 = vadd.f32 %v721, %v836
    %838 = vmatmul.bf16.gmra.mxu0 %v697
    %v839 = vpop.f32.mrf.mxu0
    %v840 = vadd.f32 %v721, %v839
    %v841 = vpop.f32.mrf.mxu0
    %v842 = vadd.f32 %v721, %v841
    %843 = vmatmul.bf16.gmra.mxu0 %v698
    %v844 = vpop.f32.mrf.mxu0
    %v845 = vadd.f32 %v721, %v844
    %v846 = vpop.f32.mrf.mxu0
    %v847 = vadd.f32 %v721, %v846
    %848 = vmatmul.bf16.gmra.mxu0 %v699
    %v849 = vpop.f32.mrf.mxu0
    %v850 = vadd.f32 %v721, %v849
    %v851 = vpop.f32.mrf.mxu0
    %v852 = vadd.f32 %v721, %v851
    %853 = vmatmul.bf16.gmra.mxu0 %v700
    %v854 = vpop.f32.mrf.mxu0
    %v855 = vadd.f32 %v721, %v854
    %v856 = vpop.f32.mrf.mxu0
    %v857 = vadd.f32 %v721, %v856
    %858 = vmatmul.bf16.gmra.mxu0 %v701
    %v859 = vpop.f32.mrf.mxu0
    %v860 = vadd.f32 %v721, %v859
    %v861 = vpop.f32.mrf.mxu0
    %v862 = vadd.f32 %v721, %v861
    %863 = vmatmul.bf16.gmra.mxu0 %v702
    %v864 = vpop.f32.mrf.mxu0
    %v865 = vadd.f32 %v721, %v864
    %v866 = vpop.f32.mrf.mxu0
    %v867 = vadd.f32 %v721, %v866
    %868 = vmatmul.bf16.gmra.mxu0 %v703
    %v869 = vpop.f32.mrf.mxu0
    %v870 = vadd.f32 %v721, %v869
    %v871 = vpop.f32.mrf.mxu0
    %v872 = vadd.f32 %v721, %v871
    %873 = vdwg.mxu0
    %v874 = vmax.f32 %v780, 0.0
    %v875 = vmax.f32 %v782, 0.0
    %v876 = vmax.f32 %v785, 0.0
    %v877 = vmax.f32 %v787, 0.0
    %v878 = vmax.f32 %v790, 0.0
    %v879 = vmax.f32 %v792, 0.0
    %v880 = vmax.f32 %v795, 0.0
    %v881 = vmax.f32 %v797, 0.0
    %v882 = vmax.f32 %v800, 0.0
    %v883 = vmax.f32 %v802, 0.0
    %v884 = vmax.f32 %v805, 0.0
    %v885 = vmax.f32 %v807, 0.0
    %v886 = vmax.f32 %v810, 0.0
    %v887 = vmax.f32 %v812, 0.0
    %v888 = vmax.f32 %v815, 0.0
    %v889 = vmax.f32 %v817, 0.0
    %v890 = vmax.f32 %v820, 0.0
    %v891 = vmax.f32 %v822, 0.0
    %v892 = vmax.f32 %v825, 0.0
    %v893 = vmax.f32 %v827, 0.0
    %v894 = vmax.f32 %v830, 0.0
    %v895 = vmax.f32 %v832, 0.0
    %v896 = vmax.f32 %v835, 0.0
    %v897 = vmax.f32 %v837, 0.0
    %v898 = vmax.f32 %v840, 0.0
    %v899 = vmax.f32 %v842, 0.0
    %v900 = vmax.f32 %v845, 0.0
    %v901 = vmax.f32 %v847, 0.0
    %v902 = vmax.f32 %v850, 0.0
    %v903 = vmax.f32 %v852, 0.0
    %v904 = vmax.f32 %v855, 0.0
    %v905 = vmax.f32 %v857, 0.0
    %v906 = vmax.f32 %v860, 0.0
    %v907 = vmax.f32 %v862, 0.0
    %v908 = vmax.f32 %v865, 0.0
    %v909 = vmax.f32 %v867, 0.0
    %v910 = vmax.f32 %v870, 0.0
    %v911 = vmax.f32 %v872, 0.0
    %v912 = vpack.c.bf16 %v875, %v874
    %v913 = vpack.c.bf16 %v877, %v876
    %v914 = vpack.c.bf16 %v879, %v878
    %v915 = vpack.c.bf16 %v881, %v880
    %v916 = vpack.c.bf16 %v883, %v882
    %v917 = vpack.c.bf16 %v885, %v884
    %v918 = vpack.c.bf16 %v887, %v886
    %v919 = vpack.c.bf16 %v889, %v888
    %v920 = vpack.c.bf16 %v891, %v890
    %v921 = vpack.c.bf16 %v893, %v892
    %v922 = vpack.c.bf16 %v895, %v894
    %v923 = vpack.c.bf16 %v897, %v896
    %v924 = vpack.c.bf16 %v899, %v898
    %v925 = vpack.c.bf16 %v901, %v900
    %v926 = vpack.c.bf16 %v903, %v902
    %v927 = vpack.c.bf16 %v905, %v904
    %v928 = vpack.c.bf16 %v907, %v906
    %v929 = vpack.c.bf16 %v909, %v908
    %v930 = vpack.c.bf16 %v911, %v910
    %v931 = vld [vmem:[%s4] sm:$0xf]
    %v932 = vld [vmem:[%s4 + $0x4] sm:$0xf]
    %v933 = vld [vmem:[%s4 + $0x8] sm:$0xf]
    %v934 = vld [vmem:[%s4 + $0xc] sm:$0xf]
    %v935 = vld [vmem:[%s4 + $0x10] sm:$0xf]
    %v936 = vld [vmem:[%s4 + $0x14] sm:$0xf]
    %v937 = vld [vmem:[%s4 + $0x18] sm:$0xf]
    %v938 = vld [vmem:[%s4 + $0x1c] sm:$0xf]
    %v939 = vld [vmem:[%s4 + $0x20] sm:$0xf]
    %v940 = vld [vmem:[%s4 + $0x24] sm:$0xf]
    %v941 = vld [vmem:[%s4 + $0x28] sm:$0xf]
    %v942 = vld [vmem:[%s4 + $0x2c] sm:$0xf]
    %v943 = vld [vmem:[%s4 + $0x30] sm:$0xf]
    %v944 = vld [vmem:[%s4 + $0x34] sm:$0xf]
    %v945 = vld [vmem:[%s4 + $0x38] sm:$0xf]
    %v946 = vld [vmem:[%s4 + $0x3c] sm:$0xf]
    %v963 = vunpack.c.l.b16 %v931
    %v964 = vunpack.c.l.b16 %v932
    %v965 = vunpack.c.l.b16 %v933
    %v966 = vunpack.c.l.b16 %v934
    %v967 = vunpack.c.l.b16 %v935
    %v968 = vunpack.c.l.b16 %v936
    %v969 = vunpack.c.l.b16 %v937
    %v970 = vunpack.c.l.b16 %v938
    %v971 = vunpack.c.l.b16 %v939
    %v972 = vunpack.c.l.b16 %v940
    %v973 = vunpack.c.l.b16 %v941
    %v974 = vunpack.c.l.b16 %v942
    %v975 = vunpack.c.l.b16 %v943
    %v976 = vunpack.c.l.b16 %v944
    %v977 = vunpack.c.l.b16 %v945
    %v978 = vunpack.c.l.b16 %v946
    %v979 = vpack.c.b16 %v964, %v963
    %v980 = vpack.c.b16 %v966, %v965
    %v981 = vpack.c.b16 %v968, %v967
    %v982 = vpack.c.b16 %v970, %v969
    %v983 = vpack.c.b16 %v972, %v971
    %v984 = vpack.c.b16 %v974, %v973
    %v985 = vpack.c.b16 %v976, %v975
    %v986 = vpack.c.b16 %v978, %v977
    %995 = vmatpush.bf16.msra.mxu0 %v986
    %996 = vmatpush.bf16.msra.mxu0 %v985
    %997 = vmatpush.bf16.msra.mxu0 %v984
    %998 = vmatpush.bf16.msra.mxu0 %v983
    %999 = vmatpush.bf16.msra.mxu0 %v982
    %1000 = vmatpush.bf16.msra.mxu0 %v981
    %1001 = vmatpush.bf16.msra.mxu0 %v980
    %1002 = vmatpush.bf16.msra.mxu0 %v979
    %1003 = vmatmul.bf16.gmra.mxu0 %v912
    %v1004 = vpop.f32.mrf.mxu0
    %v1005 = vadd.f32 %v326, %v1004
    %v1006 = vpop.f32.mrf.mxu0
    %v1007 = vadd.f32 %v328, %v1006
    %1008 = vmatmul.bf16.gmra.mxu0 %v913
    %v1009 = vpop.f32.mrf.mxu0
    %v1010 = vadd.f32 %v331, %v1009
    %v1011 = vpop.f32.mrf.mxu0
    %v1012 = vadd.f32 %v333, %v1011
    %1013 = vmatmul.bf16.gmra.mxu0 %v914
    %v1014 = vpop.f32.mrf.mxu0
    %v1015 = vadd.f32 %v336, %v1014
    %v1016 = vpop.f32.mrf.mxu0
    %v1017 = vadd.f32 %v338, %v1016
    %1018 = vmatmul.bf16.gmra.mxu0 %v915
    %v1019 = vpop.f32.mrf.mxu0
    %v1020 = vadd.f32 %v341, %v1019
    %v1021 = vpop.f32.mrf.mxu0
    %v1022 = vadd.f32 %v343, %v1021
    %1023 = vmatmul.bf16.gmra.mxu0 %v916
    %v1024 = vpop.f32.mrf.mxu0
    %v1025 = vadd.f32 %v346, %v1024
    %v1026 = vpop.f32.mrf.mxu0
    %v1027 = vadd.f32 %v348, %v1026
    %1028 = vmatmul.bf16.gmra.mxu0 %v917
    %v1029 = vpop.f32.mrf.mxu0
    %v1030 = vadd.f32 %v351, %v1029
    %v1031 = vpop.f32.mrf.mxu0
    %v1032 = vadd.f32 %v353, %v1031
    %1033 = vmatmul.bf16.gmra.mxu0 %v918
    %v1034 = vpop.f32.mrf.mxu0
    %v1035 = vadd.f32 %v356, %v1034
    %v1036 = vpop.f32.mrf.mxu0
    %v1037 = vadd.f32 %v358, %v1036
    %1038 = vmatmul.bf16.gmra.mxu0 %v919
    %v1039 = vpop.f32.mrf.mxu0
    %v1040 = vadd.f32 %v361, %v1039
    %v1041 = vpop.f32.mrf.mxu0
    %v1042 = vadd.f32 %v363, %v1041
    %1043 = vmatmul.bf16.gmra.mxu0 %v920
    %v1044 = vpop.f32.mrf.mxu0
    %v1045 = vadd.f32 %v366, %v1044
    %v1046 = vpop.f32.mrf.mxu0
    %v1047 = vadd.f32 %v368, %v1046
    %1048 = vmatmul.bf16.gmra.mxu0 %v921
    %v1049 = vpop.f32.mrf.mxu0
    %v1050 = vadd.f32 %v371, %v1049
    %v1051 = vpop.f32.mrf.mxu0
    %v1052 = vadd.f32 %v373, %v1051
    %1053 = vmatmul.bf16.gmra.mxu0 %v922
    %v1054 = vpop.f32.mrf.mxu0
    %v1055 = vadd.f32 %v376, %v1054
    %v1056 = vpop.f32.mrf.mxu0
    %v1057 = vadd.f32 %v378, %v1056
    %1058 = vmatmul.bf16.gmra.mxu0 %v923
    %v1059 = vpop.f32.mrf.mxu0
    %v1060 = vadd.f32 %v381, %v1059
    %v1061 = vpop.f32.mrf.mxu0
    %v1062 = vadd.f32 %v383, %v1061
    %1063 = vmatmul.bf16.gmra.mxu0 %v924
    %v1064 = vpop.f32.mrf.mxu0
    %v1065 = vadd.f32 %v386, %v1064
    %v1066 = vpop.f32.mrf.mxu0
    %v1067 = vadd.f32 %v388, %v1066
    %1068 = vmatmul.bf16.gmra.mxu0 %v925
    %v1069 = vpop.f32.mrf.mxu0
    %v1070 = vadd.f32 %v391, %v1069
    %v1071 = vpop.f32.mrf.mxu0
    %v1072 = vadd.f32 %v393, %v1071
    %1073 = vmatmul.bf16.gmra.mxu0 %v926
    %v1074 = vpop.f32.mrf.mxu0
    %v1075 = vadd.f32 %v396, %v1074
    %v1076 = vpop.f32.mrf.mxu0
    %v1077 = vadd.f32 %v398, %v1076
    %1078 = vmatmul.bf16.gmra.mxu0 %v927
    %v1079 = vpop.f32.mrf.mxu0
    %v1080 = vadd.f32 %v401, %v1079
    %v1081 = vpop.f32.mrf.mxu0
    %v1082 = vadd.f32 %v403, %v1081
    %1083 = vmatmul.bf16.gmra.mxu0 %v928
    %v1084 = vpop.f32.mrf.mxu0
    %v1085 = vadd.f32 %v406, %v1084
    %v1086 = vpop.f32.mrf.mxu0
    %v1087 = vadd.f32 %v408, %v1086
    %1088 = vmatmul.bf16.gmra.mxu0 %v929
    %v1089 = vpop.f32.mrf.mxu0
    %v1090 = vadd.f32 %v411, %v1089
    %v1091 = vpop.f32.mrf.mxu0
    %v1092 = vadd.f32 %v413, %v1091
    %1093 = vmatmul.bf16.gmra.mxu0 %v930
    %v1094 = vpop.f32.mrf.mxu0
    %v1095 = vadd.f32 %v416, %v1094
    %v1096 = vpop.f32.mrf.mxu0
    %v1097 = vadd.f32 %v418, %v1096
    %1098 = vdwg.mxu0
    %v1099 = vld [vmem:[%s9 + $0x3] sm:$0x1]
    %v1100 = vperm.slane %v1099, 0
    %v1101 = vadd.f32 %v1005, %v1100
    %v1102 = vadd.f32 %v1007, %v1100
    %v1103 = vadd.f32 %v1010, %v1100
    %v1104 = vadd.f32 %v1012, %v1100
    %v1105 = vadd.f32 %v1015, %v1100
    %v1106 = vadd.f32 %v1017, %v1100
    %v1107 = vadd.f32 %v1020, %v1100
    %v1108 = vadd.f32 %v1022, %v1100
    %v1109 = vadd.f32 %v1025, %v1100
    %v1110 = vadd.f32 %v1027, %v1100
    %v1111 = vadd.f32 %v1030, %v1100
    %v1112 = vadd.f32 %v1032, %v1100
    %v1113 = vadd.f32 %v1035, %v1100
    %v1114 = vadd.f32 %v1037, %v1100
    %v1115 = vadd.f32 %v1040, %v1100
    %v1116 = vadd.f32 %v1042, %v1100
    %v1117 = vadd.f32 %v1045, %v1100
    %v1118 = vadd.f32 %v1047, %v1100
    %v1119 = vadd.f32 %v1050, %v1100
    %v1120 = vadd.f32 %v1052, %v1100
    %v1121 = vadd.f32 %v1055, %v1100
    %v1122 = vadd.f32 %v1057, %v1100
    %v1123 = vadd.f32 %v1060, %v1100
    %v1124 = vadd.f32 %v1062, %v1100
    %v1125 = vadd.f32 %v1065, %v1100
    %v1126 = vadd.f32 %v1067, %v1100
    %v1127 = vadd.f32 %v1070, %v1100
    %v1128 = vadd.f32 %v1072, %v1100
    %v1129 = vadd.f32 %v1075, %v1100
    %v1130 = vadd.f32 %v1077, %v1100
    %v1131 = vadd.f32 %v1080, %v1100
    %v1132 = vadd.f32 %v1082, %v1100
    %v1133 = vadd.f32 %v1085, %v1100
    %v1134 = vadd.f32 %v1087, %v1100
    %v1135 = vadd.f32 %v1090, %v1100
    %v1136 = vadd.f32 %v1092, %v1100
    %v1137 = vadd.f32 %v1095, %v1100
    %v1138 = vadd.f32 %v1097, %v1100
    %v1139 = vmax.f32 %v1101, 0.0
    %v1140 = vmax.f32 %v1102, 0.0
    %v1141 = vmax.f32 %v1103, 0.0
    %v1142 = vmax.f32 %v1104, 0.0
    %v1143 = vmax.f32 %v1105, 0.0
    %v1144 = vmax.f32 %v1106, 0.0
    %v1145 = vmax.f32 %v1107, 0.0
    %v1146 = vmax.f32 %v1108, 0.0
    %v1147 = vmax.f32 %v1109, 0.0
    %v1148 = vmax.f32 %v1110, 0.0
    %v1149 = vmax.f32 %v1111, 0.0
    %v1150 = vmax.f32 %v1112, 0.0
    %v1151 = vmax.f32 %v1113, 0.0
    %v1152 = vmax.f32 %v1114, 0.0
    %v1153 = vmax.f32 %v1115, 0.0
    %v1154 = vmax.f32 %v1116, 0.0
    %v1155 = vmax.f32 %v1117, 0.0
    %v1156 = vmax.f32 %v1118, 0.0
    %v1157 = vmax.f32 %v1119, 0.0
    %v1158 = vmax.f32 %v1120, 0.0
    %v1159 = vmax.f32 %v1121, 0.0
    %v1160 = vmax.f32 %v1122, 0.0
    %v1161 = vmax.f32 %v1123, 0.0
    %v1162 = vmax.f32 %v1124, 0.0
    %v1163 = vmax.f32 %v1125, 0.0
    %v1164 = vmax.f32 %v1126, 0.0
    %v1165 = vmax.f32 %v1127, 0.0
    %v1166 = vmax.f32 %v1128, 0.0
    %v1167 = vmax.f32 %v1129, 0.0
    %v1168 = vmax.f32 %v1130, 0.0
    %v1169 = vmax.f32 %v1131, 0.0
    %v1170 = vmax.f32 %v1132, 0.0
    %v1171 = vmax.f32 %v1133, 0.0
    %v1172 = vmax.f32 %v1134, 0.0
    %v1173 = vmax.f32 %v1135, 0.0
    %v1174 = vmax.f32 %v1136, 0.0
    %v1175 = vmax.f32 %v1137, 0.0
    %v1176 = vmax.f32 %v1138, 0.0
    %v1177 = vpack.c.bf16 %v1140, %v1139
    %v1178 = vpack.c.bf16 %v1142, %v1141
    %v1179 = vpack.c.bf16 %v1144, %v1143
    %v1180 = vpack.c.bf16 %v1146, %v1145
    %v1181 = vpack.c.bf16 %v1148, %v1147
    %v1182 = vpack.c.bf16 %v1150, %v1149
    %v1183 = vpack.c.bf16 %v1152, %v1151
    %v1184 = vpack.c.bf16 %v1154, %v1153
    %v1185 = vpack.c.bf16 %v1156, %v1155
    %v1186 = vpack.c.bf16 %v1158, %v1157
    %v1187 = vpack.c.bf16 %v1160, %v1159
    %v1188 = vpack.c.bf16 %v1162, %v1161
    %v1189 = vpack.c.bf16 %v1164, %v1163
    %v1190 = vpack.c.bf16 %v1166, %v1165
    %v1191 = vpack.c.bf16 %v1168, %v1167
    %v1192 = vpack.c.bf16 %v1170, %v1169
    %v1193 = vpack.c.bf16 %v1172, %v1171
    %v1194 = vpack.c.bf16 %v1174, %v1173
    %v1195 = vpack.c.bf16 %v1176, %v1175
    %v1196 = vld [vmem:[#allocation2] sm:$0xf]
    %v1197 = vld [vmem:[#allocation2 + $0x4] sm:$0xf]
    %v1198 = vld [vmem:[#allocation2 + $0x8] sm:$0xf]
    %v1199 = vld [vmem:[#allocation2 + $0xc] sm:$0xf]
    %v1200 = vld [vmem:[#allocation2 + $0x10] sm:$0xf]
    %v1201 = vld [vmem:[#allocation2 + $0x14] sm:$0xf]
    %v1202 = vld [vmem:[#allocation2 + $0x18] sm:$0xf]
    %v1203 = vld [vmem:[#allocation2 + $0x1c] sm:$0xf]
    %v1204 = vld [vmem:[#allocation2 + $0x20] sm:$0xf]
    %v1205 = vld [vmem:[#allocation2 + $0x24] sm:$0xf]
    %v1206 = vld [vmem:[#allocation2 + $0x28] sm:$0xf]
    %v1207 = vld [vmem:[#allocation2 + $0x2c] sm:$0xf]
    %v1208 = vld [vmem:[#allocation2 + $0x30] sm:$0xf]
    %v1209 = vld [vmem:[#allocation2 + $0x34] sm:$0xf]
    %v1210 = vld [vmem:[#allocation2 + $0x38] sm:$0xf]
    %v1211 = vld [vmem:[#allocation2 + $0x3c] sm:$0xf]
    %v1212 = vld [vmem:[%s9 + $0x4] sm:$0x1]
    %v1213 = vperm.slane %v1212, 0
    %v1230 = vunpack.c.l.b16 %v1196
    %v1231 = vunpack.c.l.b16 %v1197
    %v1232 = vunpack.c.l.b16 %v1198
    %v1233 = vunpack.c.l.b16 %v1199
    %v1234 = vunpack.c.l.b16 %v1200
    %v1235 = vunpack.c.l.b16 %v1201
    %v1236 = vunpack.c.l.b16 %v1202
    %v1237 = vunpack.c.l.b16 %v1203
    %v1238 = vunpack.c.l.b16 %v1204
    %v1239 = vunpack.c.l.b16 %v1205
    %v1240 = vunpack.c.l.b16 %v1206
    %v1241 = vunpack.c.l.b16 %v1207
    %v1242 = vunpack.c.l.b16 %v1208
    %v1243 = vunpack.c.l.b16 %v1209
    %v1244 = vunpack.c.l.b16 %v1210
    %v1245 = vunpack.c.l.b16 %v1211
    %v1246 = vpack.c.b16 %v1231, %v1230
    %v1247 = vpack.c.b16 %v1233, %v1232
    %v1248 = vpack.c.b16 %v1235, %v1234
    %v1249 = vpack.c.b16 %v1237, %v1236
    %v1250 = vpack.c.b16 %v1239, %v1238
    %v1251 = vpack.c.b16 %v1241, %v1240
    %v1252 = vpack.c.b16 %v1243, %v1242
    %v1253 = vpack.c.b16 %v1245, %v1244
    %1262 = vmatpush.bf16.msra.mxu0 %v1253
    %1263 = vmatpush.bf16.msra.mxu0 %v1252
    %1264 = vmatpush.bf16.msra.mxu0 %v1251
    %1265 = vmatpush.bf16.msra.mxu0 %v1250
    %1266 = vmatpush.bf16.msra.mxu0 %v1249
    %1267 = vmatpush.bf16.msra.mxu0 %v1248
    %1268 = vmatpush.bf16.msra.mxu0 %v1247
    %1269 = vmatpush.bf16.msra.mxu0 %v1246
    %1270 = vmatmul.bf16.gmra.mxu0 %v1177
    %v1271 = vpop.f32.mrf.mxu0
    %v1272 = vadd.f32 %v1213, %v1271
    %v1273 = vpop.f32.mrf.mxu0
    %v1274 = vadd.f32 %v1213, %v1273
    %1275 = vmatmul.bf16.gmra.mxu0 %v1178
    %v1276 = vpop.f32.mrf.mxu0
    %v1277 = vadd.f32 %v1213, %v1276
    %v1278 = vpop.f32.mrf.mxu0
    %v1279 = vadd.f32 %v1213, %v1278
    %1280 = vmatmul.bf16.gmra.mxu0 %v1179
    %v1281 = vpop.f32.mrf.mxu0
    %v1282 = vadd.f32 %v1213, %v1281
    %v1283 = vpop.f32.mrf.mxu0
    %v1284 = vadd.f32 %v1213, %v1283
    %1285 = vmatmul.bf16.gmra.mxu0 %v1180
    %v1286 = vpop.f32.mrf.mxu0
    %v1287 = vadd.f32 %v1213, %v1286
    %v1288 = vpop.f32.mrf.mxu0
    %v1289 = vadd.f32 %v1213, %v1288
    %1290 = vmatmul.bf16.gmra.mxu0 %v1181
    %v1291 = vpop.f32.mrf.mxu0
    %v1292 = vadd.f32 %v1213, %v1291
    %v1293 = vpop.f32.mrf.mxu0
    %v1294 = vadd.f32 %v1213, %v1293
    %1295 = vmatmul.bf16.gmra.mxu0 %v1182
    %v1296 = vpop.f32.mrf.mxu0
    %v1297 = vadd.f32 %v1213, %v1296
    %v1298 = vpop.f32.mrf.mxu0
    %v1299 = vadd.f32 %v1213, %v1298
    %1300 = vmatmul.bf16.gmra.mxu0 %v1183
    %v1301 = vpop.f32.mrf.mxu0
    %v1302 = vadd.f32 %v1213, %v1301
    %v1303 = vpop.f32.mrf.mxu0
    %v1304 = vadd.f32 %v1213, %v1303
    %1305 = vmatmul.bf16.gmra.mxu0 %v1184
    %v1306 = vpop.f32.mrf.mxu0
    %v1307 = vadd.f32 %v1213, %v1306
    %v1308 = vpop.f32.mrf.mxu0
    %v1309 = vadd.f32 %v1213, %v1308
    %1310 = vmatmul.bf16.gmra.mxu0 %v1185
    %v1311 = vpop.f32.mrf.mxu0
    %v1312 = vadd.f32 %v1213, %v1311
    %v1313 = vpop.f32.mrf.mxu0
    %v1314 = vadd.f32 %v1213, %v1313
    %1315 = vmatmul.bf16.gmra.mxu0 %v1186
    %v1316 = vpop.f32.mrf.mxu0
    %v1317 = vadd.f32 %v1213, %v1316
    %v1318 = vpop.f32.mrf.mxu0
    %v1319 = vadd.f32 %v1213, %v1318
    %1320 = vmatmul.bf16.gmra.mxu0 %v1187
    %v1321 = vpop.f32.mrf.mxu0
    %v1322 = vadd.f32 %v1213, %v1321
    %v1323 = vpop.f32.mrf.mxu0
    %v1324 = vadd.f32 %v1213, %v1323
    %1325 = vmatmul.bf16.gmra.mxu0 %v1188
    %v1326 = vpop.f32.mrf.mxu0
    %v1327 = vadd.f32 %v1213, %v1326
    %v1328 = vpop.f32.mrf.mxu0
    %v1329 = vadd.f32 %v1213, %v1328
    %1330 = vmatmul.bf16.gmra.mxu0 %v1189
    %v1331 = vpop.f32.mrf.mxu0
    %v1332 = vadd.f32 %v1213, %v1331
    %v1333 = vpop.f32.mrf.mxu0
    %v1334 = vadd.f32 %v1213, %v1333
    %1335 = vmatmul.bf16.gmra.mxu0 %v1190
    %v1336 = vpop.f32.mrf.mxu0
    %v1337 = vadd.f32 %v1213, %v1336
    %v1338 = vpop.f32.mrf.mxu0
    %v1339 = vadd.f32 %v1213, %v1338
    %1340 = vmatmul.bf16.gmra.mxu0 %v1191
    %v1341 = vpop.f32.mrf.mxu0
    %v1342 = vadd.f32 %v1213, %v1341
    %v1343 = vpop.f32.mrf.mxu0
    %v1344 = vadd.f32 %v1213, %v1343
    %1345 = vmatmul.bf16.gmra.mxu0 %v1192
    %v1346 = vpop.f32.mrf.mxu0
    %v1347 = vadd.f32 %v1213, %v1346
    %v1348 = vpop.f32.mrf.mxu0
    %v1349 = vadd.f32 %v1213, %v1348
    %1350 = vmatmul.bf16.gmra.mxu0 %v1193
    %v1351 = vpop.f32.mrf.mxu0
    %v1352 = vadd.f32 %v1213, %v1351
    %v1353 = vpop.f32.mrf.mxu0
    %v1354 = vadd.f32 %v1213, %v1353
    %1355 = vmatmul.bf16.gmra.mxu0 %v1194
    %v1356 = vpop.f32.mrf.mxu0
    %v1357 = vadd.f32 %v1213, %v1356
    %v1358 = vpop.f32.mrf.mxu0
    %v1359 = vadd.f32 %v1213, %v1358
    %1360 = vmatmul.bf16.gmra.mxu0 %v1195
    %v1361 = vpop.f32.mrf.mxu0
    %v1362 = vadd.f32 %v1213, %v1361
    %v1363 = vpop.f32.mrf.mxu0
    %v1364 = vadd.f32 %v1213, %v1363
    %1365 = vdwg.mxu0
    %v1366 = vpack.c.bf16 %v1274, %v1272
    %v1367 = vpack.c.bf16 %v1279, %v1277
    %v1368 = vpack.c.bf16 %v1284, %v1282
    %v1369 = vpack.c.bf16 %v1289, %v1287
    %v1370 = vpack.c.bf16 %v1294, %v1292
    %v1371 = vpack.c.bf16 %v1299, %v1297
    %v1372 = vpack.c.bf16 %v1304, %v1302
    %v1373 = vpack.c.bf16 %v1309, %v1307
    %v1374 = vpack.c.bf16 %v1314, %v1312
    %v1375 = vpack.c.bf16 %v1319, %v1317
    %v1376 = vpack.c.bf16 %v1324, %v1322
    %v1377 = vpack.c.bf16 %v1329, %v1327
    %v1378 = vpack.c.bf16 %v1334, %v1332
    %v1379 = vpack.c.bf16 %v1339, %v1337
    %v1380 = vpack.c.bf16 %v1344, %v1342
    %v1381 = vpack.c.bf16 %v1349, %v1347
    %v1382 = vpack.c.bf16 %v1354, %v1352
    %v1383 = vpack.c.bf16 %v1359, %v1357
    %v1384 = vpack.c.bf16 %v1364, %v1362
    %v1385 = vld [vmem:[#allocation4] sm:$0xf]
    %v1386 = vld [vmem:[#allocation4 + $0x4] sm:$0xf]
    %v1387 = vld [vmem:[#allocation4 + $0x8] sm:$0xf]
    %v1388 = vld [vmem:[#allocation4 + $0xc] sm:$0xf]
    %v1389 = vld [vmem:[#allocation4 + $0x10] sm:$0xf]
    %v1390 = vld [vmem:[#allocation4 + $0x14] sm:$0xf]
    %v1391 = vld [vmem:[#allocation4 + $0x18] sm:$0xf]
    %v1392 = vld [vmem:[#allocation4 + $0x1c] sm:$0xf]
    %v1393 = vld [vmem:[#allocation4 + $0x20] sm:$0xf]
    %v1394 = vld [vmem:[#allocation4 + $0x24] sm:$0xf]
    %v1395 = vld [vmem:[#allocation4 + $0x28] sm:$0xf]
    %v1396 = vld [vmem:[#allocation4 + $0x2c] sm:$0xf]
    %v1397 = vld [vmem:[#allocation4 + $0x30] sm:$0xf]
    %v1398 = vld [vmem:[#allocation4 + $0x34] sm:$0xf]
    %v1399 = vld [vmem:[#allocation4 + $0x38] sm:$0xf]
    %v1400 = vld [vmem:[#allocation4 + $0x3c] sm:$0xf]
    %v1401 = vld [vmem:[#allocation6] sm:$0xf]
    %v1402 = vld [vmem:[#allocation6 + $0x4] sm:$0xf]
    %v1403 = vld [vmem:[#allocation6 + $0x8] sm:$0xf]
    %v1404 = vld [vmem:[#allocation6 + $0xc] sm:$0xf]
    %v1405 = vld [vmem:[#allocation6 + $0x10] sm:$0xf]
    %v1406 = vld [vmem:[#allocation6 + $0x14] sm:$0xf]
    %v1413 = vunpack.c.l.b16 %v1401
    %v1414 = vunpack.c.l.b16 %v1402
    %v1415 = vunpack.c.l.b16 %v1403
    %v1416 = vunpack.c.l.b16 %v1404
    %v1417 = vunpack.c.l.b16 %v1405
    %v1418 = vunpack.c.l.b16 %v1406
    %v1419 = vpack.c.b16 %v1414, %v1413
    %v1420 = vpack.c.b16 %v1416, %v1415
    %v1421 = vpack.c.b16 %v1418, %v1417
    %1425 = vmatpush.bf16.msra.mxu0 0
    %1426 = vmatpush.bf16.msra.mxu0 0
    %1427 = vmatpush.bf16.msra.mxu0 0
    %1428 = vmatpush.bf16.msra.mxu0 0
    %1429 = vmatpush.bf16.msra.mxu0 0
    %1430 = vmatpush.bf16.msra.mxu0 %v1421
    %1431 = vmatpush.bf16.msra.mxu0 %v1420
    %1432 = vmatpush.bf16.msra.mxu0 %v1419
    %1433 = vmatmul.bf16.gmra.mxu0 %v260
    %v1434 = vpop.f32.mrf.mxu0
    %v1435 = vadd.f32 0.0, %v1434
    %v1436 = vpop.f32.mrf.mxu0
    %v1437 = vadd.f32 0.0, %v1436
    %1438 = vmatmul.bf16.gmra.mxu0 %v263
    %v1439 = vpop.f32.mrf.mxu0
    %v1440 = vadd.f32 0.0, %v1439
    %v1441 = vpop.f32.mrf.mxu0
    %v1442 = vadd.f32 0.0, %v1441
    %1443 = vmatmul.bf16.gmra.mxu0 %v266
    %v1444 = vpop.f32.mrf.mxu0
    %v1445 = vadd.f32 0.0, %v1444
    %v1446 = vpop.f32.mrf.mxu0
    %v1447 = vadd.f32 0.0, %v1446
    %1448 = vmatmul.bf16.gmra.mxu0 %v269
    %v1449 = vpop.f32.mrf.mxu0
    %v1450 = vadd.f32 0.0, %v1449
    %v1451 = vpop.f32.mrf.mxu0
    %v1452 = vadd.f32 0.0, %v1451
    %1453 = vmatmul.bf16.gmra.mxu0 %v272
    %v1454 = vpop.f32.mrf.mxu0
    %v1455 = vadd.f32 0.0, %v1454
    %v1456 = vpop.f32.mrf.mxu0
    %v1457 = vadd.f32 0.0, %v1456
    %1458 = vmatmul.bf16.gmra.mxu0 %v275
    %v1459 = vpop.f32.mrf.mxu0
    %v1460 = vadd.f32 0.0, %v1459
    %v1461 = vpop.f32.mrf.mxu0
    %v1462 = vadd.f32 0.0, %v1461
    %1463 = vmatmul.bf16.gmra.mxu0 %v278
    %v1464 = vpop.f32.mrf.mxu0
    %v1465 = vadd.f32 0.0, %v1464
    %v1466 = vpop.f32.mrf.mxu0
    %v1467 = vadd.f32 0.0, %v1466
    %1468 = vmatmul.bf16.gmra.mxu0 %v281
    %v1469 = vpop.f32.mrf.mxu0
    %v1470 = vadd.f32 0.0, %v1469
    %v1471 = vpop.f32.mrf.mxu0
    %v1472 = vadd.f32 0.0, %v1471
    %1473 = vmatmul.bf16.gmra.mxu0 %v284
    %v1474 = vpop.f32.mrf.mxu0
    %v1475 = vadd.f32 0.0, %v1474
    %v1476 = vpop.f32.mrf.mxu0
    %v1477 = vadd.f32 0.0, %v1476
    %1478 = vmatmul.bf16.gmra.mxu0 %v287
    %v1479 = vpop.f32.mrf.mxu0
    %v1480 = vadd.f32 0.0, %v1479
    %v1481 = vpop.f32.mrf.mxu0
    %v1482 = vadd.f32 0.0, %v1481
    %1483 = vmatmul.bf16.gmra.mxu0 %v290
    %v1484 = vpop.f32.mrf.mxu0
    %v1485 = vadd.f32 0.0, %v1484
    %v1486 = vpop.f32.mrf.mxu0
    %v1487 = vadd.f32 0.0, %v1486
    %1488 = vmatmul.bf16.gmra.mxu0 %v293
    %v1489 = vpop.f32.mrf.mxu0
    %v1490 = vadd.f32 0.0, %v1489
    %v1491 = vpop.f32.mrf.mxu0
    %v1492 = vadd.f32 0.0, %v1491
    %1493 = vmatmul.bf16.gmra.mxu0 %v296
    %v1494 = vpop.f32.mrf.mxu0
    %v1495 = vadd.f32 0.0, %v1494
    %v1496 = vpop.f32.mrf.mxu0
    %v1497 = vadd.f32 0.0, %v1496
    %1498 = vmatmul.bf16.gmra.mxu0 %v299
    %v1499 = vpop.f32.mrf.mxu0
    %v1500 = vadd.f32 0.0, %v1499
    %v1501 = vpop.f32.mrf.mxu0
    %v1502 = vadd.f32 0.0, %v1501
    %1503 = vmatmul.bf16.gmra.mxu0 %v302
    %v1504 = vpop.f32.mrf.mxu0
    %v1505 = vadd.f32 0.0, %v1504
    %v1506 = vpop.f32.mrf.mxu0
    %v1507 = vadd.f32 0.0, %v1506
    %1508 = vmatmul.bf16.gmra.mxu0 %v305
    %v1509 = vpop.f32.mrf.mxu0
    %v1510 = vadd.f32 0.0, %v1509
    %v1511 = vpop.f32.mrf.mxu0
    %v1512 = vadd.f32 0.0, %v1511
    %1513 = vmatmul.bf16.gmra.mxu0 %v308
    %v1514 = vpop.f32.mrf.mxu0
    %v1515 = vadd.f32 0.0, %v1514
    %v1516 = vpop.f32.mrf.mxu0
    %v1517 = vadd.f32 0.0, %v1516
    %1518 = vmatmul.bf16.gmra.mxu0 %v311
    %v1519 = vpop.f32.mrf.mxu0
    %v1520 = vadd.f32 0.0, %v1519
    %v1521 = vpop.f32.mrf.mxu0
    %v1522 = vadd.f32 0.0, %v1521
    %1523 = vmatmul.bf16.gmra.mxu0 %v314
    %v1524 = vpop.f32.mrf.mxu0
    %v1525 = vadd.f32 0.0, %v1524
    %v1526 = vpop.f32.mrf.mxu0
    %v1527 = vadd.f32 0.0, %v1526
    %1528 = vdwg.mxu0
    %v1545 = vunpack.c.l.b16 %v1385
    %v1546 = vunpack.c.l.b16 %v1386
    %v1547 = vunpack.c.l.b16 %v1387
    %v1548 = vunpack.c.l.b16 %v1388
    %v1549 = vunpack.c.l.b16 %v1389
    %v1550 = vunpack.c.l.b16 %v1390
    %v1551 = vunpack.c.l.b16 %v1391
    %v1552 = vunpack.c.l.b16 %v1392
    %v1553 = vunpack.c.l.b16 %v1393
    %v1554 = vunpack.c.l.b16 %v1394
    %v1555 = vunpack.c.l.b16 %v1395
    %v1556 = vunpack.c.l.b16 %v1396
    %v1557 = vunpack.c.l.b16 %v1397
    %v1558 = vunpack.c.l.b16 %v1398
    %v1559 = vunpack.c.l.b16 %v1399
    %v1560 = vunpack.c.l.b16 %v1400
    %v1561 = vpack.c.b16 %v1546, %v1545
    %v1562 = vpack.c.b16 %v1548, %v1547
    %v1563 = vpack.c.b16 %v1550, %v1549
    %v1564 = vpack.c.b16 %v1552, %v1551
    %v1565 = vpack.c.b16 %v1554, %v1553
    %v1566 = vpack.c.b16 %v1556, %v1555
    %v1567 = vpack.c.b16 %v1558, %v1557
    %v1568 = vpack.c.b16 %v1560, %v1559
    %1577 = vmatpush.bf16.msra.mxu0 %v1568
    %1578 = vmatpush.bf16.msra.mxu0 %v1567
    %1579 = vmatpush.bf16.msra.mxu0 %v1566
    %1580 = vmatpush.bf16.msra.mxu0 %v1565
    %1581 = vmatpush.bf16.msra.mxu0 %v1564
    %1582 = vmatpush.bf16.msra.mxu0 %v1563
    %1583 = vmatpush.bf16.msra.mxu0 %v1562
    %1584 = vmatpush.bf16.msra.mxu0 %v1561
    %1585 = vmatmul.bf16.gmra.mxu0 %v1366
    %v1586 = vpop.f32.mrf.mxu0
    %v1587 = vadd.f32 %v1435, %v1586
    %v1588 = vpop.f32.mrf.mxu0
    %v1589 = vadd.f32 %v1437, %v1588
    %1590 = vmatmul.bf16.gmra.mxu0 %v1367
    %v1591 = vpop.f32.mrf.mxu0
    %v1592 = vadd.f32 %v1440, %v1591
    %v1593 = vpop.f32.mrf.mxu0
    %v1594 = vadd.f32 %v1442, %v1593
    %1595 = vmatmul.bf16.gmra.mxu0 %v1368
    %v1596 = vpop.f32.mrf.mxu0
    %v1597 = vadd.f32 %v1445, %v1596
    %v1598 = vpop.f32.mrf.mxu0
    %v1599 = vadd.f32 %v1447, %v1598
    %1600 = vmatmul.bf16.gmra.mxu0 %v1369
    %v1601 = vpop.f32.mrf.mxu0
    %v1602 = vadd.f32 %v1450, %v1601
    %v1603 = vpop.f32.mrf.mxu0
    %v1604 = vadd.f32 %v1452, %v1603
    %1605 = vmatmul.bf16.gmra.mxu0 %v1370
    %v1606 = vpop.f32.mrf.mxu0
    %v1607 = vadd.f32 %v1455, %v1606
    %v1608 = vpop.f32.mrf.mxu0
    %v1609 = vadd.f32 %v1457, %v1608
    %1610 = vmatmul.bf16.gmra.mxu0 %v1371
    %v1611 = vpop.f32.mrf.mxu0
    %v1612 = vadd.f32 %v1460, %v1611
    %v1613 = vpop.f32.mrf.mxu0
    %v1614 = vadd.f32 %v1462, %v1613
    %1615 = vmatmul.bf16.gmra.mxu0 %v1372
    %v1616 = vpop.f32.mrf.mxu0
    %v1617 = vadd.f32 %v1465, %v1616
    %v1618 = vpop.f32.mrf.mxu0
    %v1619 = vadd.f32 %v1467, %v1618
    %1620 = vmatmul.bf16.gmra.mxu0 %v1373
    %v1621 = vpop.f32.mrf.mxu0
    %v1622 = vadd.f32 %v1470, %v1621
    %v1623 = vpop.f32.mrf.mxu0
    %v1624 = vadd.f32 %v1472, %v1623
    %1625 = vmatmul.bf16.gmra.mxu0 %v1374
    %v1626 = vpop.f32.mrf.mxu0
    %v1627 = vadd.f32 %v1475, %v1626
    %v1628 = vpop.f32.mrf.mxu0
    %v1629 = vadd.f32 %v1477, %v1628
    %1630 = vmatmul.bf16.gmra.mxu0 %v1375
    %v1631 = vpop.f32.mrf.mxu0
    %v1632 = vadd.f32 %v1480, %v1631
    %v1633 = vpop.f32.mrf.mxu0
    %v1634 = vadd.f32 %v1482, %v1633
    %1635 = vmatmul.bf16.gmra.mxu0 %v1376
    %v1636 = vpop.f32.mrf.mxu0
    %v1637 = vadd.f32 %v1485, %v1636
    %v1638 = vpop.f32.mrf.mxu0
    %v1639 = vadd.f32 %v1487, %v1638
    %1640 = vmatmul.bf16.gmra.mxu0 %v1377
    %v1641 = vpop.f32.mrf.mxu0
    %v1642 = vadd.f32 %v1490, %v1641
    %v1643 = vpop.f32.mrf.mxu0
    %v1644 = vadd.f32 %v1492, %v1643
    %1645 = vmatmul.bf16.gmra.mxu0 %v1378
    %v1646 = vpop.f32.mrf.mxu0
    %v1647 = vadd.f32 %v1495, %v1646
    %v1648 = vpop.f32.mrf.mxu0
    %v1649 = vadd.f32 %v1497, %v1648
    %1650 = vmatmul.bf16.gmra.mxu0 %v1379
    %v1651 = vpop.f32.mrf.mxu0
    %v1652 = vadd.f32 %v1500, %v1651
    %v1653 = vpop.f32.mrf.mxu0
    %v1654 = vadd.f32 %v1502, %v1653
    %1655 = vmatmul.bf16.gmra.mxu0 %v1380
    %v1656 = vpop.f32.mrf.mxu0
    %v1657 = vadd.f32 %v1505, %v1656
    %v1658 = vpop.f32.mrf.mxu0
    %v1659 = vadd.f32 %v1507, %v1658
    %1660 = vmatmul.bf16.gmra.mxu0 %v1381
    %v1661 = vpop.f32.mrf.mxu0
    %v1662 = vadd.f32 %v1510, %v1661
    %v1663 = vpop.f32.mrf.mxu0
    %v1664 = vadd.f32 %v1512, %v1663
    %1665 = vmatmul.bf16.gmra.mxu0 %v1382
    %v1666 = vpop.f32.mrf.mxu0
    %v1667 = vadd.f32 %v1515, %v1666
    %v1668 = vpop.f32.mrf.mxu0
    %v1669 = vadd.f32 %v1517, %v1668
    %1670 = vmatmul.bf16.gmra.mxu0 %v1383
    %v1671 = vpop.f32.mrf.mxu0
    %v1672 = vadd.f32 %v1520, %v1671
    %v1673 = vpop.f32.mrf.mxu0
    %v1674 = vadd.f32 %v1522, %v1673
    %1675 = vmatmul.bf16.gmra.mxu0 %v1384
    %v1676 = vpop.f32.mrf.mxu0
    %v1677 = vadd.f32 %v1525, %v1676
    %v1678 = vpop.f32.mrf.mxu0
    %v1679 = vadd.f32 %v1527, %v1678
    %1680 = vdwg.mxu0
    %v1681 = vld [vmem:[%s9 + $0x5] sm:$0x1]
    %v1682 = vperm.slane %v1681, 0
    %v1683 = vadd.f32 %v1587, %v1682
    %v1684 = vadd.f32 %v1589, %v1682
    %v1685 = vadd.f32 %v1592, %v1682
    %v1686 = vadd.f32 %v1594, %v1682
    %v1687 = vadd.f32 %v1597, %v1682
    %v1688 = vadd.f32 %v1599, %v1682
    %v1689 = vadd.f32 %v1602, %v1682
    %v1690 = vadd.f32 %v1604, %v1682
    %v1691 = vadd.f32 %v1607, %v1682
    %v1692 = vadd.f32 %v1609, %v1682
    %v1693 = vadd.f32 %v1612, %v1682
    %v1694 = vadd.f32 %v1614, %v1682
    %v1695 = vadd.f32 %v1617, %v1682
    %v1696 = vadd.f32 %v1619, %v1682
    %v1697 = vadd.f32 %v1622, %v1682
    %v1698 = vadd.f32 %v1624, %v1682
    %v1699 = vadd.f32 %v1627, %v1682
    %v1700 = vadd.f32 %v1629, %v1682
    %v1701 = vadd.f32 %v1632, %v1682
    %v1702 = vadd.f32 %v1634, %v1682
    %v1703 = vadd.f32 %v1637, %v1682
    %v1704 = vadd.f32 %v1639, %v1682
    %v1705 = vadd.f32 %v1642, %v1682
    %v1706 = vadd.f32 %v1644, %v1682
    %v1707 = vadd.f32 %v1647, %v1682
    %v1708 = vadd.f32 %v1649, %v1682
    %v1709 = vadd.f32 %v1652, %v1682
    %v1710 = vadd.f32 %v1654, %v1682
    %v1711 = vadd.f32 %v1657, %v1682
    %v1712 = vadd.f32 %v1659, %v1682
    %v1713 = vadd.f32 %v1662, %v1682
    %v1714 = vadd.f32 %v1664, %v1682
    %v1715 = vadd.f32 %v1667, %v1682
    %v1716 = vadd.f32 %v1669, %v1682
    %v1717 = vadd.f32 %v1672, %v1682
    %v1718 = vadd.f32 %v1674, %v1682
    %v1719 = vadd.f32 %v1677, %v1682
    %v1720 = vadd.f32 %v1679, %v1682
    %v1721 = vmax.f32 %v1683, 0.0
    %v1722 = vmax.f32 %v1684, 0.0
    %v1723 = vmax.f32 %v1685, 0.0
    %v1724 = vmax.f32 %v1686, 0.0
    %v1725 = vmax.f32 %v1687, 0.0
    %v1726 = vmax.f32 %v1688, 0.0
    %v1727 = vmax.f32 %v1689, 0.0
    %v1728 = vmax.f32 %v1690, 0.0
    %v1729 = vmax.f32 %v1691, 0.0
    %v1730 = vmax.f32 %v1692, 0.0
    %v1731 = vmax.f32 %v1693, 0.0
    %v1732 = vmax.f32 %v1694, 0.0
    %v1733 = vmax.f32 %v1695, 0.0
    %v1734 = vmax.f32 %v1696, 0.0
    %v1735 = vmax.f32 %v1697, 0.0
    %v1736 = vmax.f32 %v1698, 0.0
    %v1737 = vmax.f32 %v1699, 0.0
    %v1738 = vmax.f32 %v1700, 0.0
    %v1739 = vmax.f32 %v1701, 0.0
    %v1740 = vmax.f32 %v1702, 0.0
    %v1741 = vmax.f32 %v1703, 0.0
    %v1742 = vmax.f32 %v1704, 0.0
    %v1743 = vmax.f32 %v1705, 0.0
    %v1744 = vmax.f32 %v1706, 0.0
    %v1745 = vmax.f32 %v1707, 0.0
    %v1746 = vmax.f32 %v1708, 0.0
    %v1747 = vmax.f32 %v1709, 0.0
    %v1748 = vmax.f32 %v1710, 0.0
    %v1749 = vmax.f32 %v1711, 0.0
    %v1750 = vmax.f32 %v1712, 0.0
    %v1751 = vmax.f32 %v1713, 0.0
    %v1752 = vmax.f32 %v1714, 0.0
    %v1753 = vmax.f32 %v1715, 0.0
    %v1754 = vmax.f32 %v1716, 0.0
    %v1755 = vmax.f32 %v1717, 0.0
    %v1756 = vmax.f32 %v1718, 0.0
    %v1757 = vmax.f32 %v1719, 0.0
    %v1758 = vmax.f32 %v1720, 0.0
    %v1759 = vpack.c.bf16 %v1722, %v1721
    %v1760 = vpack.c.bf16 %v1724, %v1723
    %v1761 = vpack.c.bf16 %v1726, %v1725
    %v1762 = vpack.c.bf16 %v1728, %v1727
    %v1763 = vpack.c.bf16 %v1730, %v1729
    %v1764 = vpack.c.bf16 %v1732, %v1731
    %v1765 = vpack.c.bf16 %v1734, %v1733
    %v1766 = vpack.c.bf16 %v1736, %v1735
    %v1767 = vpack.c.bf16 %v1738, %v1737
    %v1768 = vpack.c.bf16 %v1740, %v1739
    %v1769 = vpack.c.bf16 %v1742, %v1741
    %v1770 = vpack.c.bf16 %v1744, %v1743
    %v1771 = vpack.c.bf16 %v1746, %v1745
    %v1772 = vpack.c.bf16 %v1748, %v1747
    %v1773 = vpack.c.bf16 %v1750, %v1749
    %v1774 = vpack.c.bf16 %v1752, %v1751
    %v1775 = vpack.c.bf16 %v1754, %v1753
    %v1776 = vpack.c.bf16 %v1756, %v1755
    %v1777 = vpack.c.bf16 %v1758, %v1757
    %v1778 = vld [vmem:[#allocation7] sm:$0xf]
    %v1779 = vld [vmem:[#allocation7 + $0x4] sm:$0xf]
    %v1780 = vld [vmem:[#allocation7 + $0x8] sm:$0xf]
    %v1781 = vld [vmem:[#allocation7 + $0xc] sm:$0xf]
    %v1782 = vld [vmem:[#allocation7 + $0x10] sm:$0xf]
    %v1783 = vld [vmem:[#allocation7 + $0x14] sm:$0xf]
    %v1784 = vld [vmem:[#allocation7 + $0x18] sm:$0xf]
    %v1785 = vld [vmem:[#allocation7 + $0x1c] sm:$0xf]
    %v1786 = vld [vmem:[#allocation7 + $0x20] sm:$0xf]
    %v1787 = vld [vmem:[#allocation7 + $0x24] sm:$0xf]
    %v1788 = vld [vmem:[#allocation7 + $0x28] sm:$0xf]
    %v1789 = vld [vmem:[#allocation7 + $0x2c] sm:$0xf]
    %v1790 = vld [vmem:[#allocation7 + $0x30] sm:$0xf]
    %v1791 = vld [vmem:[#allocation7 + $0x34] sm:$0xf]
    %v1792 = vld [vmem:[#allocation7 + $0x38] sm:$0xf]
    %v1793 = vld [vmem:[#allocation7 + $0x3c] sm:$0xf]
    %v1794 = vld [vmem:[%s9 + $0x6] sm:$0x1]
    %v1795 = vperm.slane %v1794, 0
    %v1812 = vunpack.c.l.b16 %v1778
    %v1813 = vunpack.c.l.b16 %v1779
    %v1814 = vunpack.c.l.b16 %v1780
    %v1815 = vunpack.c.l.b16 %v1781
    %v1816 = vunpack.c.l.b16 %v1782
    %v1817 = vunpack.c.l.b16 %v1783
    %v1818 = vunpack.c.l.b16 %v1784
    %v1819 = vunpack.c.l.b16 %v1785
    %v1820 = vunpack.c.l.b16 %v1786
    %v1821 = vunpack.c.l.b16 %v1787
    %v1822 = vunpack.c.l.b16 %v1788
    %v1823 = vunpack.c.l.b16 %v1789
    %v1824 = vunpack.c.l.b16 %v1790
    %v1825 = vunpack.c.l.b16 %v1791
    %v1826 = vunpack.c.l.b16 %v1792
    %v1827 = vunpack.c.l.b16 %v1793
    %v1828 = vpack.c.b16 %v1813, %v1812
    %v1829 = vpack.c.b16 %v1815, %v1814
    %v1830 = vpack.c.b16 %v1817, %v1816
    %v1831 = vpack.c.b16 %v1819, %v1818
    %v1832 = vpack.c.b16 %v1821, %v1820
    %v1833 = vpack.c.b16 %v1823, %v1822
    %v1834 = vpack.c.b16 %v1825, %v1824
    %v1835 = vpack.c.b16 %v1827, %v1826
    %1844 = vmatpush.bf16.msra.mxu0 %v1835
    %1845 = vmatpush.bf16.msra.mxu0 %v1834
    %1846 = vmatpush.bf16.msra.mxu0 %v1833
    %1847 = vmatpush.bf16.msra.mxu0 %v1832
    %1848 = vmatpush.bf16.msra.mxu0 %v1831
    %1849 = vmatpush.bf16.msra.mxu0 %v1830
    %1850 = vmatpush.bf16.msra.mxu0 %v1829
    %1851 = vmatpush.bf16.msra.mxu0 %v1828
    %1852 = vmatmul.bf16.gmra.mxu0 %v1759
    %v1853 = vpop.f32.mrf.mxu0
    %v1854 = vadd.f32 %v1795, %v1853
    %v1855 = vpop.f32.mrf.mxu0
    %v1856 = vadd.f32 %v1795, %v1855
    %1857 = vmatmul.bf16.gmra.mxu0 %v1760
    %v1858 = vpop.f32.mrf.mxu0
    %v1859 = vadd.f32 %v1795, %v1858
    %v1860 = vpop.f32.mrf.mxu0
    %v1861 = vadd.f32 %v1795, %v1860
    %1862 = vmatmul.bf16.gmra.mxu0 %v1761
    %v1863 = vpop.f32.mrf.mxu0
    %v1864 = vadd.f32 %v1795, %v1863
    %v1865 = vpop.f32.mrf.mxu0
    %v1866 = vadd.f32 %v1795, %v1865
    %1867 = vmatmul.bf16.gmra.mxu0 %v1762
    %v1868 = vpop.f32.mrf.mxu0
    %v1869 = vadd.f32 %v1795, %v1868
    %v1870 = vpop.f32.mrf.mxu0
    %v1871 = vadd.f32 %v1795, %v1870
    %1872 = vmatmul.bf16.gmra.mxu0 %v1763
    %v1873 = vpop.f32.mrf.mxu0
    %v1874 = vadd.f32 %v1795, %v1873
    %v1875 = vpop.f32.mrf.mxu0
    %v1876 = vadd.f32 %v1795, %v1875
    %1877 = vmatmul.bf16.gmra.mxu0 %v1764
    %v1878 = vpop.f32.mrf.mxu0
    %v1879 = vadd.f32 %v1795, %v1878
    %v1880 = vpop.f32.mrf.mxu0
    %v1881 = vadd.f32 %v1795, %v1880
    %1882 = vmatmul.bf16.gmra.mxu0 %v1765
    %v1883 = vpop.f32.mrf.mxu0
    %v1884 = vadd.f32 %v1795, %v1883
    %v1885 = vpop.f32.mrf.mxu0
    %v1886 = vadd.f32 %v1795, %v1885
    %1887 = vmatmul.bf16.gmra.mxu0 %v1766
    %v1888 = vpop.f32.mrf.mxu0
    %v1889 = vadd.f32 %v1795, %v1888
    %v1890 = vpop.f32.mrf.mxu0
    %v1891 = vadd.f32 %v1795, %v1890
    %1892 = vmatmul.bf16.gmra.mxu0 %v1767
    %v1893 = vpop.f32.mrf.mxu0
    %v1894 = vadd.f32 %v1795, %v1893
    %v1895 = vpop.f32.mrf.mxu0
    %v1896 = vadd.f32 %v1795, %v1895
    %1897 = vmatmul.bf16.gmra.mxu0 %v1768
    %v1898 = vpop.f32.mrf.mxu0
    %v1899 = vadd.f32 %v1795, %v1898
    %v1900 = vpop.f32.mrf.mxu0
    %v1901 = vadd.f32 %v1795, %v1900
    %1902 = vmatmul.bf16.gmra.mxu0 %v1769
    %v1903 = vpop.f32.mrf.mxu0
    %v1904 = vadd.f32 %v1795, %v1903
    %v1905 = vpop.f32.mrf.mxu0
    %v1906 = vadd.f32 %v1795, %v1905
    %1907 = vmatmul.bf16.gmra.mxu0 %v1770
    %v1908 = vpop.f32.mrf.mxu0
    %v1909 = vadd.f32 %v1795, %v1908
    %v1910 = vpop.f32.mrf.mxu0
    %v1911 = vadd.f32 %v1795, %v1910
    %1912 = vmatmul.bf16.gmra.mxu0 %v1771
    %v1913 = vpop.f32.mrf.mxu0
    %v1914 = vadd.f32 %v1795, %v1913
    %v1915 = vpop.f32.mrf.mxu0
    %v1916 = vadd.f32 %v1795, %v1915
    %1917 = vmatmul.bf16.gmra.mxu0 %v1772
    %v1918 = vpop.f32.mrf.mxu0
    %v1919 = vadd.f32 %v1795, %v1918
    %v1920 = vpop.f32.mrf.mxu0
    %v1921 = vadd.f32 %v1795, %v1920
    %1922 = vmatmul.bf16.gmra.mxu0 %v1773
    %v1923 = vpop.f32.mrf.mxu0
    %v1924 = vadd.f32 %v1795, %v1923
    %v1925 = vpop.f32.mrf.mxu0
    %v1926 = vadd.f32 %v1795, %v1925
    %1927 = vmatmul.bf16.gmra.mxu0 %v1774
    %v1928 = vpop.f32.mrf.mxu0
    %v1929 = vadd.f32 %v1795, %v1928
    %v1930 = vpop.f32.mrf.mxu0
    %v1931 = vadd.f32 %v1795, %v1930
    %1932 = vmatmul.bf16.gmra.mxu0 %v1775
    %v1933 = vpop.f32.mrf.mxu0
    %v1934 = vadd.f32 %v1795, %v1933
    %v1935 = vpop.f32.mrf.mxu0
    %v1936 = vadd.f32 %v1795, %v1935
    %1937 = vmatmul.bf16.gmra.mxu0 %v1776
    %v1938 = vpop.f32.mrf.mxu0
    %v1939 = vadd.f32 %v1795, %v1938
    %v1940 = vpop.f32.mrf.mxu0
    %v1941 = vadd.f32 %v1795, %v1940
    %1942 = vmatmul.bf16.gmra.mxu0 %v1777
    %v1943 = vpop.f32.mrf.mxu0
    %v1944 = vadd.f32 %v1795, %v1943
    %v1945 = vpop.f32.mrf.mxu0
    %v1946 = vadd.f32 %v1795, %v1945
    %1947 = vdwg.mxu0
    %v1948 = vlaneseq
    %v1949 = vand.u32 %v1948, 127
    %vm1950 = vcmp.lt.s32.totalorder %v1949, 3
    %v1951 = vxor.u32 %v1854, 2147483648
    %v1952 = vxor.u32 %v1856, 2147483648
    %v1953 = vxor.u32 %v1859, 2147483648
    %v1954 = vxor.u32 %v1861, 2147483648
    %v1955 = vxor.u32 %v1864, 2147483648
    %v1956 = vxor.u32 %v1866, 2147483648
    %v1957 = vxor.u32 %v1869, 2147483648
    %v1958 = vxor.u32 %v1871, 2147483648
    %v1959 = vxor.u32 %v1874, 2147483648
    %v1960 = vxor.u32 %v1876, 2147483648
    %v1961 = vxor.u32 %v1879, 2147483648
    %v1962 = vxor.u32 %v1881, 2147483648
    %v1963 = vxor.u32 %v1884, 2147483648
    %v1964 = vxor.u32 %v1886, 2147483648
    %v1965 = vxor.u32 %v1889, 2147483648
    %v1966 = vxor.u32 %v1891, 2147483648
    %v1967 = vxor.u32 %v1894, 2147483648
    %v1968 = vxor.u32 %v1896, 2147483648
    %v1969 = vxor.u32 %v1899, 2147483648
    %v1970 = vxor.u32 %v1901, 2147483648
    %v1971 = vxor.u32 %v1904, 2147483648
    %v1972 = vxor.u32 %v1906, 2147483648
    %v1973 = vxor.u32 %v1909, 2147483648
    %v1974 = vxor.u32 %v1911, 2147483648
    %v1975 = vxor.u32 %v1914, 2147483648
    %v1976 = vxor.u32 %v1916, 2147483648
    %v1977 = vxor.u32 %v1919, 2147483648
    %v1978 = vxor.u32 %v1921, 2147483648
    %v1979 = vxor.u32 %v1924, 2147483648
    %v1980 = vxor.u32 %v1926, 2147483648
    %v1981 = vxor.u32 %v1929, 2147483648
    %v1982 = vxor.u32 %v1931, 2147483648
    %v1983 = vxor.u32 %v1934, 2147483648
    %v1984 = vxor.u32 %v1936, 2147483648
    %v1985 = vxor.u32 %v1939, 2147483648
    %v1986 = vxor.u32 %v1941, 2147483648
    %v1987 = vxor.u32 %v1944, 2147483648
    %v1988 = vxor.u32 %v1946, 2147483648
    %v1989 = vmul.f32 %v1951, 1.442695
    %v1990 = vpow.pop %v1989
    %v1991 = vmul.f32 %v1952, 1.442695
    %v1992 = vpow.pop %v1991
    %v1993 = vmul.f32 %v1953, 1.442695
    %v1994 = vpow.pop %v1993
    %v1995 = vmul.f32 %v1954, 1.442695
    %v1996 = vpow.pop %v1995
    %v1997 = vmul.f32 %v1955, 1.442695
    %v1998 = vpow.pop %v1997
    %v1999 = vmul.f32 %v1956, 1.442695
    %v2000 = vpow.pop %v1999
    %v2001 = vmul.f32 %v1957, 1.442695
    %v2002 = vpow.pop %v2001
    %v2003 = vmul.f32 %v1958, 1.442695
    %v2004 = vpow.pop %v2003
    %v2005 = vmul.f32 %v1959, 1.442695
    %v2006 = vpow.pop %v2005
    %v2007 = vmul.f32 %v1960, 1.442695
    %v2008 = vpow.pop %v2007
    %v2009 = vmul.f32 %v1961, 1.442695
    %v2010 = vpow.pop %v2009
    %v2011 = vmul.f32 %v1962, 1.442695
    %v2012 = vpow.pop %v2011
    %v2013 = vmul.f32 %v1963, 1.442695
    %v2014 = vpow.pop %v2013
    %v2015 = vmul.f32 %v1964, 1.442695
    %v2016 = vpow.pop %v2015
    %v2017 = vmul.f32 %v1965, 1.442695
    %v2018 = vpow.pop %v2017
    %v2019 = vmul.f32 %v1966, 1.442695
    %v2020 = vpow.pop %v2019
    %v2021 = vmul.f32 %v1967, 1.442695
    %v2022 = vpow.pop %v2021
    %v2023 = vmul.f32 %v1968, 1.442695
    %v2024 = vpow.pop %v2023
    %v2025 = vmul.f32 %v1969, 1.442695
    %v2026 = vpow.pop %v2025
    %v2027 = vmul.f32 %v1970, 1.442695
    %v2028 = vpow.pop %v2027
    %v2029 = vmul.f32 %v1971, 1.442695
    %v2030 = vpow.pop %v2029
    %v2031 = vmul.f32 %v1972, 1.442695
    %v2032 = vpow.pop %v2031
    %v2033 = vmul.f32 %v1973, 1.442695
    %v2034 = vpow.pop %v2033
    %v2035 = vmul.f32 %v1974, 1.442695
    %v2036 = vpow.pop %v2035
    %v2037 = vmul.f32 %v1975, 1.442695
    %v2038 = vpow.pop %v2037
    %v2039 = vmul.f32 %v1976, 1.442695
    %v2040 = vpow.pop %v2039
    %v2041 = vmul.f32 %v1977, 1.442695
    %v2042 = vpow.pop %v2041
    %v2043 = vmul.f32 %v1978, 1.442695
    %v2044 = vpow.pop %v2043
    %v2045 = vmul.f32 %v1979, 1.442695
    %v2046 = vpow.pop %v2045
    %v2047 = vmul.f32 %v1980, 1.442695
    %v2048 = vpow.pop %v2047
    %v2049 = vmul.f32 %v1981, 1.442695
    %v2050 = vpow.pop %v2049
    %v2051 = vmul.f32 %v1982, 1.442695
    %v2052 = vpow.pop %v2051
    %v2053 = vmul.f32 %v1983, 1.442695
    %v2054 = vpow.pop %v2053
    %v2055 = vmul.f32 %v1984, 1.442695
    %v2056 = vpow.pop %v2055
    %v2057 = vmul.f32 %v1985, 1.442695
    %v2058 = vpow.pop %v2057
    %v2059 = vmul.f32 %v1986, 1.442695
    %v2060 = vpow.pop %v2059
    %v2061 = vmul.f32 %v1987, 1.442695
    %v2062 = vpow.pop %v2061
    %v2063 = vmul.f32 %v1988, 1.442695
    %v2064 = vpow.pop %v2063
    %v2065 = vadd.f32 %v1990, 1.0
    %v2066 = vadd.f32 %v1992, 1.0
    %v2067 = vadd.f32 %v1994, 1.0
    %v2068 = vadd.f32 %v1996, 1.0
    %v2069 = vadd.f32 %v1998, 1.0
    %v2070 = vadd.f32 %v2000, 1.0
    %v2071 = vadd.f32 %v2002, 1.0
    %v2072 = vadd.f32 %v2004, 1.0
    %v2073 = vadd.f32 %v2006, 1.0
    %v2074 = vadd.f32 %v2008, 1.0
    %v2075 = vadd.f32 %v2010, 1.0
    %v2076 = vadd.f32 %v2012, 1.0
    %v2077 = vadd.f32 %v2014, 1.0
    %v2078 = vadd.f32 %v2016, 1.0
    %v2079 = vadd.f32 %v2018, 1.0
    %v2080 = vadd.f32 %v2020, 1.0
    %v2081 = vadd.f32 %v2022, 1.0
    %v2082 = vadd.f32 %v2024, 1.0
    %v2083 = vadd.f32 %v2026, 1.0
    %v2084 = vadd.f32 %v2028, 1.0
    %v2085 = vadd.f32 %v2030, 1.0
    %v2086 = vadd.f32 %v2032, 1.0
    %v2087 = vadd.f32 %v2034, 1.0
    %v2088 = vadd.f32 %v2036, 1.0
    %v2089 = vadd.f32 %v2038, 1.0
    %v2090 = vadd.f32 %v2040, 1.0
    %v2091 = vadd.f32 %v2042, 1.0
    %v2092 = vadd.f32 %v2044, 1.0
    %v2093 = vadd.f32 %v2046, 1.0
    %v2094 = vadd.f32 %v2048, 1.0
    %v2095 = vadd.f32 %v2050, 1.0
    %v2096 = vadd.f32 %v2052, 1.0
    %v2097 = vadd.f32 %v2054, 1.0
    %v2098 = vadd.f32 %v2056, 1.0
    %v2099 = vadd.f32 %v2058, 1.0
    %v2100 = vadd.f32 %v2060, 1.0
    %v2101 = vadd.f32 %v2062, 1.0
    %v2102 = vadd.f32 %v2064, 1.0
    %v2103 = vrcp.pop %v2065
    %v2104 = vmul.f32 %v2065, %v2103
    %v2105 = vsub.f32 1.0, %v2104
    %v2106 = vmul.f32 %v2103, %v2105
    %v2107 = vadd.f32 %v2103, %v2106
    %vm2108 = vweird.f32 %v2065
    %vm2109 = vweird.f32 %v2103
    %vm2110 = vmor %vm2108, %vm2109
    %v2111 = vsel %vm2110, %v2103, %v2107
    %v2112 = vand.u32 2147483647, %v2065
    %vm2113 = vcmp.eq.f32.partialorder %v2112, 8.507059e+37
    %v2114 = vand.u32 %v2065, 2147483648
    %v2115 = vor.u32 1.1754944e-38, %v2114
    %v2116 = vsel %vm2113, %v2115, %v2111
    %v2117 = vmul.f32 1.0, %v2116
    %v2118 = vrcp.pop %v2066
    %v2119 = vmul.f32 %v2066, %v2118
    %v2120 = vsub.f32 1.0, %v2119
    %v2121 = vmul.f32 %v2118, %v2120
    %v2122 = vadd.f32 %v2118, %v2121
    %vm2123 = vweird.f32 %v2066
    %vm2124 = vweird.f32 %v2118
    %vm2125 = vmor %vm2123, %vm2124
    %v2126 = vsel %vm2125, %v2118, %v2122
    %v2127 = vand.u32 2147483647, %v2066
    %vm2128 = vcmp.eq.f32.partialorder %v2127, 8.507059e+37
    %v2129 = vand.u32 %v2066, 2147483648
    %v2130 = vor.u32 1.1754944e-38, %v2129
    %v2131 = vsel %vm2128, %v2130, %v2126
    %v2132 = vmul.f32 1.0, %v2131
    %v2133 = vrcp.pop %v2067
    %v2134 = vmul.f32 %v2067, %v2133
    %v2135 = vsub.f32 1.0, %v2134
    %v2136 = vmul.f32 %v2133, %v2135
    %v2137 = vadd.f32 %v2133, %v2136
    %vm2138 = vweird.f32 %v2067
    %vm2139 = vweird.f32 %v2133
    %vm2140 = vmor %vm2138, %vm2139
    %v2141 = vsel %vm2140, %v2133, %v2137
    %v2142 = vand.u32 2147483647, %v2067
    %vm2143 = vcmp.eq.f32.partialorder %v2142, 8.507059e+37
    %v2144 = vand.u32 %v2067, 2147483648
    %v2145 = vor.u32 1.1754944e-38, %v2144
    %v2146 = vsel %vm2143, %v2145, %v2141
    %v2147 = vmul.f32 1.0, %v2146
    %v2148 = vrcp.pop %v2068
    %v2149 = vmul.f32 %v2068, %v2148
    %v2150 = vsub.f32 1.0, %v2149
    %v2151 = vmul.f32 %v2148, %v2150
    %v2152 = vadd.f32 %v2148, %v2151
    %vm2153 = vweird.f32 %v2068
    %vm2154 = vweird.f32 %v2148
    %vm2155 = vmor %vm2153, %vm2154
    %v2156 = vsel %vm2155, %v2148, %v2152
    %v2157 = vand.u32 2147483647, %v2068
    %vm2158 = vcmp.eq.f32.partialorder %v2157, 8.507059e+37
    %v2159 = vand.u32 %v2068, 2147483648
    %v2160 = vor.u32 1.1754944e-38, %v2159
    %v2161 = vsel %vm2158, %v2160, %v2156
    %v2162 = vmul.f32 1.0, %v2161
    %v2163 = vrcp.pop %v2069
    %v2164 = vmul.f32 %v2069, %v2163
    %v2165 = vsub.f32 1.0, %v2164
    %v2166 = vmul.f32 %v2163, %v2165
    %v2167 = vadd.f32 %v2163, %v2166
    %vm2168 = vweird.f32 %v2069
    %vm2169 = vweird.f32 %v2163
    %vm2170 = vmor %vm2168, %vm2169
    %v2171 = vsel %vm2170, %v2163, %v2167
    %v2172 = vand.u32 2147483647, %v2069
    %vm2173 = vcmp.eq.f32.partialorder %v2172, 8.507059e+37
    %v2174 = vand.u32 %v2069, 2147483648
    %v2175 = vor.u32 1.1754944e-38, %v2174
    %v2176 = vsel %vm2173, %v2175, %v2171
    %v2177 = vmul.f32 1.0, %v2176
    %v2178 = vrcp.pop %v2070
    %v2179 = vmul.f32 %v2070, %v2178
    %v2180 = vsub.f32 1.0, %v2179
    %v2181 = vmul.f32 %v2178, %v2180
    %v2182 = vadd.f32 %v2178, %v2181
    %vm2183 = vweird.f32 %v2070
    %vm2184 = vweird.f32 %v2178
    %vm2185 = vmor %vm2183, %vm2184
    %v2186 = vsel %vm2185, %v2178, %v2182
    %v2187 = vand.u32 2147483647, %v2070
    %vm2188 = vcmp.eq.f32.partialorder %v2187, 8.507059e+37
    %v2189 = vand.u32 %v2070, 2147483648
    %v2190 = vor.u32 1.1754944e-38, %v2189
    %v2191 = vsel %vm2188, %v2190, %v2186
    %v2192 = vmul.f32 1.0, %v2191
    %v2193 = vrcp.pop %v2071
    %v2194 = vmul.f32 %v2071, %v2193
    %v2195 = vsub.f32 1.0, %v2194
    %v2196 = vmul.f32 %v2193, %v2195
    %v2197 = vadd.f32 %v2193, %v2196
    %vm2198 = vweird.f32 %v2071
    %vm2199 = vweird.f32 %v2193
    %vm2200 = vmor %vm2198, %vm2199
    %v2201 = vsel %vm2200, %v2193, %v2197
    %v2202 = vand.u32 2147483647, %v2071
    %vm2203 = vcmp.eq.f32.partialorder %v2202, 8.507059e+37
    %v2204 = vand.u32 %v2071, 2147483648
    %v2205 = vor.u32 1.1754944e-38, %v2204
    %v2206 = vsel %vm2203, %v2205, %v2201
    %v2207 = vmul.f32 1.0, %v2206
    %v2208 = vrcp.pop %v2072
    %v2209 = vmul.f32 %v2072, %v2208
    %v2210 = vsub.f32 1.0, %v2209
    %v2211 = vmul.f32 %v2208, %v2210
    %v2212 = vadd.f32 %v2208, %v2211
    %vm2213 = vweird.f32 %v2072
    %vm2214 = vweird.f32 %v2208
    %vm2215 = vmor %vm2213, %vm2214
    %v2216 = vsel %vm2215, %v2208, %v2212
    %v2217 = vand.u32 2147483647, %v2072
    %vm2218 = vcmp.eq.f32.partialorder %v2217, 8.507059e+37
    %v2219 = vand.u32 %v2072, 2147483648
    %v2220 = vor.u32 1.1754944e-38, %v2219
    %v2221 = vsel %vm2218, %v2220, %v2216
    %v2222 = vmul.f32 1.0, %v2221
    %v2223 = vrcp.pop %v2073
    %v2224 = vmul.f32 %v2073, %v2223
    %v2225 = vsub.f32 1.0, %v2224
    %v2226 = vmul.f32 %v2223, %v2225
    %v2227 = vadd.f32 %v2223, %v2226
    %vm2228 = vweird.f32 %v2073
    %vm2229 = vweird.f32 %v2223
    %vm2230 = vmor %vm2228, %vm2229
    %v2231 = vsel %vm2230, %v2223, %v2227
    %v2232 = vand.u32 2147483647, %v2073
    %vm2233 = vcmp.eq.f32.partialorder %v2232, 8.507059e+37
    %v2234 = vand.u32 %v2073, 2147483648
    %v2235 = vor.u32 1.1754944e-38, %v2234
    %v2236 = vsel %vm2233, %v2235, %v2231
    %v2237 = vmul.f32 1.0, %v2236
    %v2238 = vrcp.pop %v2074
    %v2239 = vmul.f32 %v2074, %v2238
    %v2240 = vsub.f32 1.0, %v2239
    %v2241 = vmul.f32 %v2238, %v2240
    %v2242 = vadd.f32 %v2238, %v2241
    %vm2243 = vweird.f32 %v2074
    %vm2244 = vweird.f32 %v2238
    %vm2245 = vmor %vm2243, %vm2244
    %v2246 = vsel %vm2245, %v2238, %v2242
    %v2247 = vand.u32 2147483647, %v2074
    %vm2248 = vcmp.eq.f32.partialorder %v2247, 8.507059e+37
    %v2249 = vand.u32 %v2074, 2147483648
    %v2250 = vor.u32 1.1754944e-38, %v2249
    %v2251 = vsel %vm2248, %v2250, %v2246
    %v2252 = vmul.f32 1.0, %v2251
    %v2253 = vrcp.pop %v2075
    %v2254 = vmul.f32 %v2075, %v2253
    %v2255 = vsub.f32 1.0, %v2254
    %v2256 = vmul.f32 %v2253, %v2255
    %v2257 = vadd.f32 %v2253, %v2256
    %vm2258 = vweird.f32 %v2075
    %vm2259 = vweird.f32 %v2253
    %vm2260 = vmor %vm2258, %vm2259
    %v2261 = vsel %vm2260, %v2253, %v2257
    %v2262 = vand.u32 2147483647, %v2075
    %vm2263 = vcmp.eq.f32.partialorder %v2262, 8.507059e+37
    %v2264 = vand.u32 %v2075, 2147483648
    %v2265 = vor.u32 1.1754944e-38, %v2264
    %v2266 = vsel %vm2263, %v2265, %v2261
    %v2267 = vmul.f32 1.0, %v2266
    %v2268 = vrcp.pop %v2076
    %v2269 = vmul.f32 %v2076, %v2268
    %v2270 = vsub.f32 1.0, %v2269
    %v2271 = vmul.f32 %v2268, %v2270
    %v2272 = vadd.f32 %v2268, %v2271
    %vm2273 = vweird.f32 %v2076
    %vm2274 = vweird.f32 %v2268
    %vm2275 = vmor %vm2273, %vm2274
    %v2276 = vsel %vm2275, %v2268, %v2272
    %v2277 = vand.u32 2147483647, %v2076
    %vm2278 = vcmp.eq.f32.partialorder %v2277, 8.507059e+37
    %v2279 = vand.u32 %v2076, 2147483648
    %v2280 = vor.u32 1.1754944e-38, %v2279
    %v2281 = vsel %vm2278, %v2280, %v2276
    %v2282 = vmul.f32 1.0, %v2281
    %v2283 = vrcp.pop %v2077
    %v2284 = vmul.f32 %v2077, %v2283
    %v2285 = vsub.f32 1.0, %v2284
    %v2286 = vmul.f32 %v2283, %v2285
    %v2287 = vadd.f32 %v2283, %v2286
    %vm2288 = vweird.f32 %v2077
    %vm2289 = vweird.f32 %v2283
    %vm2290 = vmor %vm2288, %vm2289
    %v2291 = vsel %vm2290, %v2283, %v2287
    %v2292 = vand.u32 2147483647, %v2077
    %vm2293 = vcmp.eq.f32.partialorder %v2292, 8.507059e+37
    %v2294 = vand.u32 %v2077, 2147483648
    %v2295 = vor.u32 1.1754944e-38, %v2294
    %v2296 = vsel %vm2293, %v2295, %v2291
    %v2297 = vmul.f32 1.0, %v2296
    %v2298 = vrcp.pop %v2078
    %v2299 = vmul.f32 %v2078, %v2298
    %v2300 = vsub.f32 1.0, %v2299
    %v2301 = vmul.f32 %v2298, %v2300
    %v2302 = vadd.f32 %v2298, %v2301
    %vm2303 = vweird.f32 %v2078
    %vm2304 = vweird.f32 %v2298
    %vm2305 = vmor %vm2303, %vm2304
    %v2306 = vsel %vm2305, %v2298, %v2302
    %v2307 = vand.u32 2147483647, %v2078
    %vm2308 = vcmp.eq.f32.partialorder %v2307, 8.507059e+37
    %v2309 = vand.u32 %v2078, 2147483648
    %v2310 = vor.u32 1.1754944e-38, %v2309
    %v2311 = vsel %vm2308, %v2310, %v2306
    %v2312 = vmul.f32 1.0, %v2311
    %v2313 = vrcp.pop %v2079
    %v2314 = vmul.f32 %v2079, %v2313
    %v2315 = vsub.f32 1.0, %v2314
    %v2316 = vmul.f32 %v2313, %v2315
    %v2317 = vadd.f32 %v2313, %v2316
    %vm2318 = vweird.f32 %v2079
    %vm2319 = vweird.f32 %v2313
    %vm2320 = vmor %vm2318, %vm2319
    %v2321 = vsel %vm2320, %v2313, %v2317
    %v2322 = vand.u32 2147483647, %v2079
    %vm2323 = vcmp.eq.f32.partialorder %v2322, 8.507059e+37
    %v2324 = vand.u32 %v2079, 2147483648
    %v2325 = vor.u32 1.1754944e-38, %v2324
    %v2326 = vsel %vm2323, %v2325, %v2321
    %v2327 = vmul.f32 1.0, %v2326
    %v2328 = vrcp.pop %v2080
    %v2329 = vmul.f32 %v2080, %v2328
    %v2330 = vsub.f32 1.0, %v2329
    %v2331 = vmul.f32 %v2328, %v2330
    %v2332 = vadd.f32 %v2328, %v2331
    %vm2333 = vweird.f32 %v2080
    %vm2334 = vweird.f32 %v2328
    %vm2335 = vmor %vm2333, %vm2334
    %v2336 = vsel %vm2335, %v2328, %v2332
    %v2337 = vand.u32 2147483647, %v2080
    %vm2338 = vcmp.eq.f32.partialorder %v2337, 8.507059e+37
    %v2339 = vand.u32 %v2080, 2147483648
    %v2340 = vor.u32 1.1754944e-38, %v2339
    %v2341 = vsel %vm2338, %v2340, %v2336
    %v2342 = vmul.f32 1.0, %v2341
    %v2343 = vrcp.pop %v2081
    %v2344 = vmul.f32 %v2081, %v2343
    %v2345 = vsub.f32 1.0, %v2344
    %v2346 = vmul.f32 %v2343, %v2345
    %v2347 = vadd.f32 %v2343, %v2346
    %vm2348 = vweird.f32 %v2081
    %vm2349 = vweird.f32 %v2343
    %vm2350 = vmor %vm2348, %vm2349
    %v2351 = vsel %vm2350, %v2343, %v2347
    %v2352 = vand.u32 2147483647, %v2081
    %vm2353 = vcmp.eq.f32.partialorder %v2352, 8.507059e+37
    %v2354 = vand.u32 %v2081, 2147483648
    %v2355 = vor.u32 1.1754944e-38, %v2354
    %v2356 = vsel %vm2353, %v2355, %v2351
    %v2357 = vmul.f32 1.0, %v2356
    %v2358 = vrcp.pop %v2082
    %v2359 = vmul.f32 %v2082, %v2358
    %v2360 = vsub.f32 1.0, %v2359
    %v2361 = vmul.f32 %v2358, %v2360
    %v2362 = vadd.f32 %v2358, %v2361
    %vm2363 = vweird.f32 %v2082
    %vm2364 = vweird.f32 %v2358
    %vm2365 = vmor %vm2363, %vm2364
    %v2366 = vsel %vm2365, %v2358, %v2362
    %v2367 = vand.u32 2147483647, %v2082
    %vm2368 = vcmp.eq.f32.partialorder %v2367, 8.507059e+37
    %v2369 = vand.u32 %v2082, 2147483648
    %v2370 = vor.u32 1.1754944e-38, %v2369
    %v2371 = vsel %vm2368, %v2370, %v2366
    %v2372 = vmul.f32 1.0, %v2371
    %v2373 = vrcp.pop %v2083
    %v2374 = vmul.f32 %v2083, %v2373
    %v2375 = vsub.f32 1.0, %v2374
    %v2376 = vmul.f32 %v2373, %v2375
    %v2377 = vadd.f32 %v2373, %v2376
    %vm2378 = vweird.f32 %v2083
    %vm2379 = vweird.f32 %v2373
    %vm2380 = vmor %vm2378, %vm2379
    %v2381 = vsel %vm2380, %v2373, %v2377
    %v2382 = vand.u32 2147483647, %v2083
    %vm2383 = vcmp.eq.f32.partialorder %v2382, 8.507059e+37
    %v2384 = vand.u32 %v2083, 2147483648
    %v2385 = vor.u32 1.1754944e-38, %v2384
    %v2386 = vsel %vm2383, %v2385, %v2381
    %v2387 = vmul.f32 1.0, %v2386
    %v2388 = vrcp.pop %v2084
    %v2389 = vmul.f32 %v2084, %v2388
    %v2390 = vsub.f32 1.0, %v2389
    %v2391 = vmul.f32 %v2388, %v2390
    %v2392 = vadd.f32 %v2388, %v2391
    %vm2393 = vweird.f32 %v2084
    %vm2394 = vweird.f32 %v2388
    %vm2395 = vmor %vm2393, %vm2394
    %v2396 = vsel %vm2395, %v2388, %v2392
    %v2397 = vand.u32 2147483647, %v2084
    %vm2398 = vcmp.eq.f32.partialorder %v2397, 8.507059e+37
    %v2399 = vand.u32 %v2084, 2147483648
    %v2400 = vor.u32 1.1754944e-38, %v2399
    %v2401 = vsel %vm2398, %v2400, %v2396
    %v2402 = vmul.f32 1.0, %v2401
    %v2403 = vrcp.pop %v2085
    %v2404 = vmul.f32 %v2085, %v2403
    %v2405 = vsub.f32 1.0, %v2404
    %v2406 = vmul.f32 %v2403, %v2405
    %v2407 = vadd.f32 %v2403, %v2406
    %vm2408 = vweird.f32 %v2085
    %vm2409 = vweird.f32 %v2403
    %vm2410 = vmor %vm2408, %vm2409
    %v2411 = vsel %vm2410, %v2403, %v2407
    %v2412 = vand.u32 2147483647, %v2085
    %vm2413 = vcmp.eq.f32.partialorder %v2412, 8.507059e+37
    %v2414 = vand.u32 %v2085, 2147483648
    %v2415 = vor.u32 1.1754944e-38, %v2414
    %v2416 = vsel %vm2413, %v2415, %v2411
    %v2417 = vmul.f32 1.0, %v2416
    %v2418 = vrcp.pop %v2086
    %v2419 = vmul.f32 %v2086, %v2418
    %v2420 = vsub.f32 1.0, %v2419
    %v2421 = vmul.f32 %v2418, %v2420
    %v2422 = vadd.f32 %v2418, %v2421
    %vm2423 = vweird.f32 %v2086
    %vm2424 = vweird.f32 %v2418
    %vm2425 = vmor %vm2423, %vm2424
    %v2426 = vsel %vm2425, %v2418, %v2422
    %v2427 = vand.u32 2147483647, %v2086
    %vm2428 = vcmp.eq.f32.partialorder %v2427, 8.507059e+37
    %v2429 = vand.u32 %v2086, 2147483648
    %v2430 = vor.u32 1.1754944e-38, %v2429
    %v2431 = vsel %vm2428, %v2430, %v2426
    %v2432 = vmul.f32 1.0, %v2431
    %v2433 = vrcp.pop %v2087
    %v2434 = vmul.f32 %v2087, %v2433
    %v2435 = vsub.f32 1.0, %v2434
    %v2436 = vmul.f32 %v2433, %v2435
    %v2437 = vadd.f32 %v2433, %v2436
    %vm2438 = vweird.f32 %v2087
    %vm2439 = vweird.f32 %v2433
    %vm2440 = vmor %vm2438, %vm2439
    %v2441 = vsel %vm2440, %v2433, %v2437
    %v2442 = vand.u32 2147483647, %v2087
    %vm2443 = vcmp.eq.f32.partialorder %v2442, 8.507059e+37
    %v2444 = vand.u32 %v2087, 2147483648
    %v2445 = vor.u32 1.1754944e-38, %v2444
    %v2446 = vsel %vm2443, %v2445, %v2441
    %v2447 = vmul.f32 1.0, %v2446
    %v2448 = vrcp.pop %v2088
    %v2449 = vmul.f32 %v2088, %v2448
    %v2450 = vsub.f32 1.0, %v2449
    %v2451 = vmul.f32 %v2448, %v2450
    %v2452 = vadd.f32 %v2448, %v2451
    %vm2453 = vweird.f32 %v2088
    %vm2454 = vweird.f32 %v2448
    %vm2455 = vmor %vm2453, %vm2454
    %v2456 = vsel %vm2455, %v2448, %v2452
    %v2457 = vand.u32 2147483647, %v2088
    %vm2458 = vcmp.eq.f32.partialorder %v2457, 8.507059e+37
    %v2459 = vand.u32 %v2088, 2147483648
    %v2460 = vor.u32 1.1754944e-38, %v2459
    %v2461 = vsel %vm2458, %v2460, %v2456
    %v2462 = vmul.f32 1.0, %v2461
    %v2463 = vrcp.pop %v2089
    %v2464 = vmul.f32 %v2089, %v2463
    %v2465 = vsub.f32 1.0, %v2464
    %v2466 = vmul.f32 %v2463, %v2465
    %v2467 = vadd.f32 %v2463, %v2466
    %vm2468 = vweird.f32 %v2089
    %vm2469 = vweird.f32 %v2463
    %vm2470 = vmor %vm2468, %vm2469
    %v2471 = vsel %vm2470, %v2463, %v2467
    %v2472 = vand.u32 2147483647, %v2089
    %vm2473 = vcmp.eq.f32.partialorder %v2472, 8.507059e+37
    %v2474 = vand.u32 %v2089, 2147483648
    %v2475 = vor.u32 1.1754944e-38, %v2474
    %v2476 = vsel %vm2473, %v2475, %v2471
    %v2477 = vmul.f32 1.0, %v2476
    %v2478 = vrcp.pop %v2090
    %v2479 = vmul.f32 %v2090, %v2478
    %v2480 = vsub.f32 1.0, %v2479
    %v2481 = vmul.f32 %v2478, %v2480
    %v2482 = vadd.f32 %v2478, %v2481
    %vm2483 = vweird.f32 %v2090
    %vm2484 = vweird.f32 %v2478
    %vm2485 = vmor %vm2483, %vm2484
    %v2486 = vsel %vm2485, %v2478, %v2482
    %v2487 = vand.u32 2147483647, %v2090
    %vm2488 = vcmp.eq.f32.partialorder %v2487, 8.507059e+37
    %v2489 = vand.u32 %v2090, 2147483648
    %v2490 = vor.u32 1.1754944e-38, %v2489
    %v2491 = vsel %vm2488, %v2490, %v2486
    %v2492 = vmul.f32 1.0, %v2491
    %v2493 = vrcp.pop %v2091
    %v2494 = vmul.f32 %v2091, %v2493
    %v2495 = vsub.f32 1.0, %v2494
    %v2496 = vmul.f32 %v2493, %v2495
    %v2497 = vadd.f32 %v2493, %v2496
    %vm2498 = vweird.f32 %v2091
    %vm2499 = vweird.f32 %v2493
    %vm2500 = vmor %vm2498, %vm2499
    %v2501 = vsel %vm2500, %v2493, %v2497
    %v2502 = vand.u32 2147483647, %v2091
    %vm2503 = vcmp.eq.f32.partialorder %v2502, 8.507059e+37
    %v2504 = vand.u32 %v2091, 2147483648
    %v2505 = vor.u32 1.1754944e-38, %v2504
    %v2506 = vsel %vm2503, %v2505, %v2501
    %v2507 = vmul.f32 1.0, %v2506
    %v2508 = vrcp.pop %v2092
    %v2509 = vmul.f32 %v2092, %v2508
    %v2510 = vsub.f32 1.0, %v2509
    %v2511 = vmul.f32 %v2508, %v2510
    %v2512 = vadd.f32 %v2508, %v2511
    %vm2513 = vweird.f32 %v2092
    %vm2514 = vweird.f32 %v2508
    %vm2515 = vmor %vm2513, %vm2514
    %v2516 = vsel %vm2515, %v2508, %v2512
    %v2517 = vand.u32 2147483647, %v2092
    %vm2518 = vcmp.eq.f32.partialorder %v2517, 8.507059e+37
    %v2519 = vand.u32 %v2092, 2147483648
    %v2520 = vor.u32 1.1754944e-38, %v2519
    %v2521 = vsel %vm2518, %v2520, %v2516
    %v2522 = vmul.f32 1.0, %v2521
    %v2523 = vrcp.pop %v2093
    %v2524 = vmul.f32 %v2093, %v2523
    %v2525 = vsub.f32 1.0, %v2524
    %v2526 = vmul.f32 %v2523, %v2525
    %v2527 = vadd.f32 %v2523, %v2526
    %vm2528 = vweird.f32 %v2093
    %vm2529 = vweird.f32 %v2523
    %vm2530 = vmor %vm2528, %vm2529
    %v2531 = vsel %vm2530, %v2523, %v2527
    %v2532 = vand.u32 2147483647, %v2093
    %vm2533 = vcmp.eq.f32.partialorder %v2532, 8.507059e+37
    %v2534 = vand.u32 %v2093, 2147483648
    %v2535 = vor.u32 1.1754944e-38, %v2534
    %v2536 = vsel %vm2533, %v2535, %v2531
    %v2537 = vmul.f32 1.0, %v2536
    %v2538 = vrcp.pop %v2094
    %v2539 = vmul.f32 %v2094, %v2538
    %v2540 = vsub.f32 1.0, %v2539
    %v2541 = vmul.f32 %v2538, %v2540
    %v2542 = vadd.f32 %v2538, %v2541
    %vm2543 = vweird.f32 %v2094
    %vm2544 = vweird.f32 %v2538
    %vm2545 = vmor %vm2543, %vm2544
    %v2546 = vsel %vm2545, %v2538, %v2542
    %v2547 = vand.u32 2147483647, %v2094
    %vm2548 = vcmp.eq.f32.partialorder %v2547, 8.507059e+37
    %v2549 = vand.u32 %v2094, 2147483648
    %v2550 = vor.u32 1.1754944e-38, %v2549
    %v2551 = vsel %vm2548, %v2550, %v2546
    %v2552 = vmul.f32 1.0, %v2551
    %v2553 = vrcp.pop %v2095
    %v2554 = vmul.f32 %v2095, %v2553
    %v2555 = vsub.f32 1.0, %v2554
    %v2556 = vmul.f32 %v2553, %v2555
    %v2557 = vadd.f32 %v2553, %v2556
    %vm2558 = vweird.f32 %v2095
    %vm2559 = vweird.f32 %v2553
    %vm2560 = vmor %vm2558, %vm2559
    %v2561 = vsel %vm2560, %v2553, %v2557
    %v2562 = vand.u32 2147483647, %v2095
    %vm2563 = vcmp.eq.f32.partialorder %v2562, 8.507059e+37
    %v2564 = vand.u32 %v2095, 2147483648
    %v2565 = vor.u32 1.1754944e-38, %v2564
    %v2566 = vsel %vm2563, %v2565, %v2561
    %v2567 = vmul.f32 1.0, %v2566
    %v2568 = vrcp.pop %v2096
    %v2569 = vmul.f32 %v2096, %v2568
    %v2570 = vsub.f32 1.0, %v2569
    %v2571 = vmul.f32 %v2568, %v2570
    %v2572 = vadd.f32 %v2568, %v2571
    %vm2573 = vweird.f32 %v2096
    %vm2574 = vweird.f32 %v2568
    %vm2575 = vmor %vm2573, %vm2574
    %v2576 = vsel %vm2575, %v2568, %v2572
    %v2577 = vand.u32 2147483647, %v2096
    %vm2578 = vcmp.eq.f32.partialorder %v2577, 8.507059e+37
    %v2579 = vand.u32 %v2096, 2147483648
    %v2580 = vor.u32 1.1754944e-38, %v2579
    %v2581 = vsel %vm2578, %v2580, %v2576
    %v2582 = vmul.f32 1.0, %v2581
    %v2583 = vrcp.pop %v2097
    %v2584 = vmul.f32 %v2097, %v2583
    %v2585 = vsub.f32 1.0, %v2584
    %v2586 = vmul.f32 %v2583, %v2585
    %v2587 = vadd.f32 %v2583, %v2586
    %vm2588 = vweird.f32 %v2097
    %vm2589 = vweird.f32 %v2583
    %vm2590 = vmor %vm2588, %vm2589
    %v2591 = vsel %vm2590, %v2583, %v2587
    %v2592 = vand.u32 2147483647, %v2097
    %vm2593 = vcmp.eq.f32.partialorder %v2592, 8.507059e+37
    %v2594 = vand.u32 %v2097, 2147483648
    %v2595 = vor.u32 1.1754944e-38, %v2594
    %v2596 = vsel %vm2593, %v2595, %v2591
    %v2597 = vmul.f32 1.0, %v2596
    %v2598 = vrcp.pop %v2098
    %v2599 = vmul.f32 %v2098, %v2598
    %v2600 = vsub.f32 1.0, %v2599
    %v2601 = vmul.f32 %v2598, %v2600
    %v2602 = vadd.f32 %v2598, %v2601
    %vm2603 = vweird.f32 %v2098
    %vm2604 = vweird.f32 %v2598
    %vm2605 = vmor %vm2603, %vm2604
    %v2606 = vsel %vm2605, %v2598, %v2602
    %v2607 = vand.u32 2147483647, %v2098
    %vm2608 = vcmp.eq.f32.partialorder %v2607, 8.507059e+37
    %v2609 = vand.u32 %v2098, 2147483648
    %v2610 = vor.u32 1.1754944e-38, %v2609
    %v2611 = vsel %vm2608, %v2610, %v2606
    %v2612 = vmul.f32 1.0, %v2611
    %v2613 = vrcp.pop %v2099
    %v2614 = vmul.f32 %v2099, %v2613
    %v2615 = vsub.f32 1.0, %v2614
    %v2616 = vmul.f32 %v2613, %v2615
    %v2617 = vadd.f32 %v2613, %v2616
    %vm2618 = vweird.f32 %v2099
    %vm2619 = vweird.f32 %v2613
    %vm2620 = vmor %vm2618, %vm2619
    %v2621 = vsel %vm2620, %v2613, %v2617
    %v2622 = vand.u32 2147483647, %v2099
    %vm2623 = vcmp.eq.f32.partialorder %v2622, 8.507059e+37
    %v2624 = vand.u32 %v2099, 2147483648
    %v2625 = vor.u32 1.1754944e-38, %v2624
    %v2626 = vsel %vm2623, %v2625, %v2621
    %v2627 = vmul.f32 1.0, %v2626
    %v2628 = vrcp.pop %v2100
    %v2629 = vmul.f32 %v2100, %v2628
    %v2630 = vsub.f32 1.0, %v2629
    %v2631 = vmul.f32 %v2628, %v2630
    %v2632 = vadd.f32 %v2628, %v2631
    %vm2633 = vweird.f32 %v2100
    %vm2634 = vweird.f32 %v2628
    %vm2635 = vmor %vm2633, %vm2634
    %v2636 = vsel %vm2635, %v2628, %v2632
    %v2637 = vand.u32 2147483647, %v2100
    %vm2638 = vcmp.eq.f32.partialorder %v2637, 8.507059e+37
    %v2639 = vand.u32 %v2100, 2147483648
    %v2640 = vor.u32 1.1754944e-38, %v2639
    %v2641 = vsel %vm2638, %v2640, %v2636
    %v2642 = vmul.f32 1.0, %v2641
    %v2643 = vrcp.pop %v2101
    %v2644 = vmul.f32 %v2101, %v2643
    %v2645 = vsub.f32 1.0, %v2644
    %v2646 = vmul.f32 %v2643, %v2645
    %v2647 = vadd.f32 %v2643, %v2646
    %vm2648 = vweird.f32 %v2101
    %vm2649 = vweird.f32 %v2643
    %vm2650 = vmor %vm2648, %vm2649
    %v2651 = vsel %vm2650, %v2643, %v2647
    %v2652 = vand.u32 2147483647, %v2101
    %vm2653 = vcmp.eq.f32.partialorder %v2652, 8.507059e+37
    %v2654 = vand.u32 %v2101, 2147483648
    %v2655 = vor.u32 1.1754944e-38, %v2654
    %v2656 = vsel %vm2653, %v2655, %v2651
    %v2657 = vmul.f32 1.0, %v2656
    %v2658 = vrcp.pop %v2102
    %v2659 = vmul.f32 %v2102, %v2658
    %v2660 = vsub.f32 1.0, %v2659
    %v2661 = vmul.f32 %v2658, %v2660
    %v2662 = vadd.f32 %v2658, %v2661
    %vm2663 = vweird.f32 %v2102
    %vm2664 = vweird.f32 %v2658
    %vm2665 = vmor %vm2663, %vm2664
    %v2666 = vsel %vm2665, %v2658, %v2662
    %v2667 = vand.u32 2147483647, %v2102
    %vm2668 = vcmp.eq.f32.partialorder %v2667, 8.507059e+37
    %v2669 = vand.u32 %v2102, 2147483648
    %v2670 = vor.u32 1.1754944e-38, %v2669
    %v2671 = vsel %vm2668, %v2670, %v2666
    %v2672 = vmul.f32 1.0, %v2671
    %v2673 = vmax.f32 %v1854, 0.0
    %v2674 = vmax.f32 %v1856, 0.0
    %v2675 = vmax.f32 %v1859, 0.0
    %v2676 = vmax.f32 %v1861, 0.0
    %v2677 = vmax.f32 %v1864, 0.0
    %v2678 = vmax.f32 %v1866, 0.0
    %v2679 = vmax.f32 %v1869, 0.0
    %v2680 = vmax.f32 %v1871, 0.0
    %v2681 = vmax.f32 %v1874, 0.0
    %v2682 = vmax.f32 %v1876, 0.0
    %v2683 = vmax.f32 %v1879, 0.0
    %v2684 = vmax.f32 %v1881, 0.0
    %v2685 = vmax.f32 %v1884, 0.0
    %v2686 = vmax.f32 %v1886, 0.0
    %v2687 = vmax.f32 %v1889, 0.0
    %v2688 = vmax.f32 %v1891, 0.0
    %v2689 = vmax.f32 %v1894, 0.0
    %v2690 = vmax.f32 %v1896, 0.0
    %v2691 = vmax.f32 %v1899, 0.0
    %v2692 = vmax.f32 %v1901, 0.0
    %v2693 = vmax.f32 %v1904, 0.0
    %v2694 = vmax.f32 %v1906, 0.0
    %v2695 = vmax.f32 %v1909, 0.0
    %v2696 = vmax.f32 %v1911, 0.0
    %v2697 = vmax.f32 %v1914, 0.0
    %v2698 = vmax.f32 %v1916, 0.0
    %v2699 = vmax.f32 %v1919, 0.0
    %v2700 = vmax.f32 %v1921, 0.0
    %v2701 = vmax.f32 %v1924, 0.0
    %v2702 = vmax.f32 %v1926, 0.0
    %v2703 = vmax.f32 %v1929, 0.0
    %v2704 = vmax.f32 %v1931, 0.0
    %v2705 = vmax.f32 %v1934, 0.0
    %v2706 = vmax.f32 %v1936, 0.0
    %v2707 = vmax.f32 %v1939, 0.0
    %v2708 = vmax.f32 %v1941, 0.0
    %v2709 = vmax.f32 %v1944, 0.0
    %v2710 = vmax.f32 %v1946, 0.0
    %v2711 = vsel %vm1950, %v2117, %v2673
    %v2712 = vsel %vm1950, %v2132, %v2674
    %v2713 = vsel %vm1950, %v2147, %v2675
    %v2714 = vsel %vm1950, %v2162, %v2676
    %v2715 = vsel %vm1950, %v2177, %v2677
    %v2716 = vsel %vm1950, %v2192, %v2678
    %v2717 = vsel %vm1950, %v2207, %v2679
    %v2718 = vsel %vm1950, %v2222, %v2680
    %v2719 = vsel %vm1950, %v2237, %v2681
    %v2720 = vsel %vm1950, %v2252, %v2682
    %v2721 = vsel %vm1950, %v2267, %v2683
    %v2722 = vsel %vm1950, %v2282, %v2684
    %v2723 = vsel %vm1950, %v2297, %v2685
    %v2724 = vsel %vm1950, %v2312, %v2686
    %v2725 = vsel %vm1950, %v2327, %v2687
    %v2726 = vsel %vm1950, %v2342, %v2688
    %v2727 = vsel %vm1950, %v2357, %v2689
    %v2728 = vsel %vm1950, %v2372, %v2690
    %v2729 = vsel %vm1950, %v2387, %v2691
    %v2730 = vsel %vm1950, %v2402, %v2692
    %v2731 = vsel %vm1950, %v2417, %v2693
    %v2732 = vsel %vm1950, %v2432, %v2694
    %v2733 = vsel %vm1950, %v2447, %v2695
    %v2734 = vsel %vm1950, %v2462, %v2696
    %v2735 = vsel %vm1950, %v2477, %v2697
    %v2736 = vsel %vm1950, %v2492, %v2698
    %v2737 = vsel %vm1950, %v2507, %v2699
    %v2738 = vsel %vm1950, %v2522, %v2700
    %v2739 = vsel %vm1950, %v2537, %v2701
    %v2740 = vsel %vm1950, %v2552, %v2702
    %v2741 = vsel %vm1950, %v2567, %v2703
    %v2742 = vsel %vm1950, %v2582, %v2704
    %v2743 = vsel %vm1950, %v2597, %v2705
    %v2744 = vsel %vm1950, %v2612, %v2706
    %v2745 = vsel %vm1950, %v2627, %v2707
    %v2746 = vsel %vm1950, %v2642, %v2708
    %v2747 = vsel %vm1950, %v2657, %v2709
    %v2748 = vsel %vm1950, %v2672, %v2710
    %vm2749 = vcmask 31744
    %2750 = vst.msk [vmem:[%s10] sm:$0xff] %vm2749, %v2711
    %2751 = vst.msk [vmem:[%s10 + $0x8] sm:$0xff] %vm2749, %v2712
    %2752 = vst.msk [vmem:[%s10 + $0x10] sm:$0xff] %vm2749, %v2713
    %2753 = vst.msk [vmem:[%s10 + $0x18] sm:$0xff] %vm2749, %v2714
    %2754 = vst.msk [vmem:[%s10 + $0x20] sm:$0xff] %vm2749, %v2715
    %2755 = vst.msk [vmem:[%s10 + $0x28] sm:$0xff] %vm2749, %v2716
    %2756 = vst.msk [vmem:[%s10 + $0x30] sm:$0xff] %vm2749, %v2717
    %2757 = vst.msk [vmem:[%s10 + $0x38] sm:$0xff] %vm2749, %v2718
    %2758 = vst.msk [vmem:[%s10 + $0x40] sm:$0xff] %vm2749, %v2719
    %2759 = vst.msk [vmem:[%s10 + $0x48] sm:$0xff] %vm2749, %v2720
    %2760 = vst.msk [vmem:[%s10 + $0x50] sm:$0xff] %vm2749, %v2721
    %2761 = vst.msk [vmem:[%s10 + $0x58] sm:$0xff] %vm2749, %v2722
    %2762 = vst.msk [vmem:[%s10 + $0x60] sm:$0xff] %vm2749, %v2723
    %2763 = vst.msk [vmem:[%s10 + $0x68] sm:$0xff] %vm2749, %v2724
    %2764 = vst.msk [vmem:[%s10 + $0x70] sm:$0xff] %vm2749, %v2725
    %2765 = vst.msk [vmem:[%s10 + $0x78] sm:$0xff] %vm2749, %v2726
    %2766 = vst.msk [vmem:[%s10 + $0x80] sm:$0xff] %vm2749, %v2727
    %2767 = vst.msk [vmem:[%s10 + $0x88] sm:$0xff] %vm2749, %v2728
    %2768 = vst.msk [vmem:[%s10 + $0x90] sm:$0xff] %vm2749, %v2729
    %2769 = vst.msk [vmem:[%s10 + $0x98] sm:$0xff] %vm2749, %v2730
    %2770 = vst.msk [vmem:[%s10 + $0xa0] sm:$0xff] %vm2749, %v2731
    %2771 = vst.msk [vmem:[%s10 + $0xa8] sm:$0xff] %vm2749, %v2732
    %2772 = vst.msk [vmem:[%s10 + $0xb0] sm:$0xff] %vm2749, %v2733
    %2773 = vst.msk [vmem:[%s10 + $0xb8] sm:$0xff] %vm2749, %v2734
    %2774 = vst.msk [vmem:[%s10 + $0xc0] sm:$0xff] %vm2749, %v2735
    %2775 = vst.msk [vmem:[%s10 + $0xc8] sm:$0xff] %vm2749, %v2736
    %2776 = vst.msk [vmem:[%s10 + $0xd0] sm:$0xff] %vm2749, %v2737
    %2777 = vst.msk [vmem:[%s10 + $0xd8] sm:$0xff] %vm2749, %v2738
    %2778 = vst.msk [vmem:[%s10 + $0xe0] sm:$0xff] %vm2749, %v2739
    %2779 = vst.msk [vmem:[%s10 + $0xe8] sm:$0xff] %vm2749, %v2740
    %2780 = vst.msk [vmem:[%s10 + $0xf0] sm:$0xff] %vm2749, %v2741
    %2781 = vst.msk [vmem:[%s10 + $0xf8] sm:$0xff] %vm2749, %v2742
    %2782 = vst.msk [vmem:[%s10 + $0x100] sm:$0xff] %vm2749, %v2743
    %2783 = vst.msk [vmem:[%s10 + $0x108] sm:$0xff] %vm2749, %v2744
    %2784 = vst.msk [vmem:[%s10 + $0x110] sm:$0xff] %vm2749, %v2745
    %2785 = vst.msk [vmem:[%s10 + $0x118] sm:$0xff] %vm2749, %v2746
    %2786 = vst.msk [vmem:[%s10 + $0x120] sm:$0xff] %vm2749, %v2747
    %2787 = vst.msk [vmem:[%s10 + $0x128] sm:$0xff] %vm2749, %v2748
    // Predicated region
    $region58: #{tpu_custom_call.1} parent=1 // pred_check
      _
    $region59: #{tpu_custom_call.1} parent=1 // pred_check_branch
      %2789 = sbr.rel (0) target = $region61
    $region60: #{tpu_custom_call.1} parent=1 // pred_region
      _
    $region61: #{tpu_custom_call.1} parent=1 // pred_fallthru
      _
    // Predicated region
    $region62: #{tpu_custom_call.1} parent=1 // pred_check
      _
    $region63: #{tpu_custom_call.1} parent=1 // pred_check_branch
      %2791 = sbr.rel (0) target = $region65
    $region64: #{tpu_custom_call.1} parent=1 // pred_region
      _
    $region65: #{tpu_custom_call.1} parent=1 // pred_fallthru
      _
    %2792 = vsyncpa [#allocation3], 1
    %2793 = vsyncpa [#allocation5], 1
    %2794 = vsyncpa [#allocation8], 1

</llo_original>
